<compile_context>
chip_gen: v6e
topology: v6e:2x2x1
jax: 0.10.0
libtpu: 0.0.40
codegen_flags: <defaults>
</compile_context>

<pallas_src>
import numpy as np
import jax
import jax.numpy as jnp
from jax.experimental import pallas as pl
from jax.experimental.pallas import tpu as pltpu


# ---------------------------------------------------------------------------
# Kernel 1: fused (nearest-x2 upsample -> conv3x3 -> +bias) as a single im2col
#           matmul at ORIGINAL resolution, plus per-batch BN partial statistics.
# ---------------------------------------------------------------------------
def _upconv_matmul_kernel(xp_ref, w_ref, b_ref, y_ref, stat_ref):
    # xp_ref  : (1, Hin+2, Win+2, Cin)  bf16  original-resolution input, zero-padded by 1
    # w_ref   : (9*Cin, 4*Cout)         bf16  subpixel-folded conv weights
    # b_ref   : (1, 4*Cout)             f32   bias, tiled over the 4 (a,b) parities
    # y_ref   : (1, Hin*Win, 4*Cout)    f32   conv+bias output; columns = (a, b, cout)
    # stat_ref: (1, 2, 4*Cout)          f32   per-batch [sum ; sum-of-squares]
    _, Hp, Wp, Cin = xp_ref.shape
    Hin, Win = Hp - 2, Wp - 2
    M = Hin * Win

    xp = xp_ref[...]
    # im2col at ORIGINAL resolution -> one (M, 9*Cin) patch matrix, then a single MXU matmul
    # (replaces nine tiny K=Cin dots each preceded by a full-image reshape copy).
    cols = [xp[0, kh:kh + Hin, kw:kw + Win, :].reshape(M, Cin)
            for kh in range(3) for kw in range(3)]
    patches = jnp.concatenate(cols, axis=-1)                        # (M, 9*Cin) bf16
    acc = jnp.dot(patches, w_ref[...],
                  preferred_element_type=jnp.float32)               # (M, 4*Cout) f32
    acc = acc + b_ref[...]                                          # bias broadcast
    y_ref[...] = acc[None, :, :]

    # Per-batch partial BN statistics (two direct row updates, no concatenate).
    # NOTE: E[x^2]-E[x]^2 in f32 is fine at these magnitudes; switch to a shifted/two-pass
    # reduction if activations grow large.
    stat_ref[:, 0:1, :] = jnp.sum(acc, axis=0, keepdims=True)[None, :, :]
    stat_ref[:, 1:2, :] = jnp.sum(acc * acc, axis=0, keepdims=True)[None, :, :]


# ---------------------------------------------------------------------------
# Kernel 2: fused affine batch-norm + ReLU on a lane-dense flat view.
# ---------------------------------------------------------------------------
def _bn_relu_kernel(y_ref, scale_ref, shift_ref, o_ref):
    # y_ref/o_ref: (tr, Win*4*Cout) f32 (lane-dense); scale/shift: (1, Win*4*Cout) f32
    o_ref[...] = jnp.maximum(y_ref[...] * scale_ref[...] + shift_ref[...], 0.0)


# ---------------------------------------------------------------------------
# Wrapper-side weight folding:  Upsample(x2 nearest) o Conv3x3(pad=1)  ==  for each output
# parity (a,b) a 3x3 conv at original resolution whose taps are 0/1-recombinations of the
# original taps.  Folded into one (9*Cin, 4*Cout) matrix; columns ordered (a, b, cout).
# ---------------------------------------------------------------------------
def _make_wcat(w):
    # w: (Cout, Cin, 3, 3) PyTorch OIHW -> (9*Cin, 4*Cout) f32
    Cout, Cin = w.shape[0], w.shape[1]
    w_hwio = jnp.transpose(w, (2, 3, 1, 0)).astype(jnp.float32)     # (3, 3, Cin, Cout)
    # m[a, window_row, original_row]: which original tap rows land on which window row
    # for output rows of parity a (same matrix applies to columns / parity b).
    m = jnp.array([[[1., 0., 0.], [0., 1., 1.], [0., 0., 0.]],
                   [[0., 0., 0.], [1., 1., 0.], [0., 0., 1.]]], jnp.float32)
    w3 = jnp.einsum('apk,bql,klio->pqiabo', m, m, w_hwio)           # (3,3,Cin,2,2,Cout)
    return w3.reshape(9 * Cin, 4 * Cout)


def init_up_conv_params(key, ch_in, ch_out):
    k1, k2, k3, k4 = jax.random.split(key, 4)
    return {
        "w": 0.1 * jax.random.normal(k1, (ch_out, ch_in, 3, 3), jnp.float32),  # PyTorch OIHW
        "b": 0.1 * jax.random.normal(k2, (ch_out,), jnp.float32),
        "gamma": 1.0 + 0.1 * jax.random.normal(k3, (ch_out,), jnp.float32),
        "beta": 0.1 * jax.random.normal(k4, (ch_out,), jnp.float32),
    }


def up_conv_forward(x_nchw, params, eps=1e-5):
    w, b = params["w"], params["b"]
    gamma, beta = params["gamma"], params["beta"]
    N, Cin, Hin, Win = x_nchw.shape
    Cout = w.shape[0]
    H, W = 2 * Hin, 2 * Win
    C4 = 4 * Cout
    M = Hin * Win

    # Layout plumbing on the SMALL original-resolution input only (bf16 for the MXU);
    # the upsampled image is never written to HBM.
    x = jnp.transpose(x_nchw, (0, 2, 3, 1)).astype(jnp.bfloat16)    # NCHW -> NHWC
    xp = jnp.pad(x, ((0, 0), (1, 1), (1, 1), (0, 0)))               # pad=1 at original res

    w_cat = _make_wcat(w).astype(jnp.bfloat16)                      # (9*Cin, 4*Cout)
    b_cat = jnp.tile(b, 4).reshape(1, C4).astype(jnp.float32)       # bias per (a,b,cout) col

    # --- Pallas kernel 1: single im2col matmul + bias + per-batch BN partial sums ---------
    # TODO(synk): for large UNet feature maps, tile kernel-1's grid over rows (Hin blocks
    #             with a +2 halo) and over 4*Cout so live double-buffered VMEM stays within
    #             v7x's 64 MiB; at these test shapes whole-image blocks are tiny.
    conv_out, stats = pl.pallas_call(
        _upconv_matmul_kernel,
        out_shape=(jax.ShapeDtypeStruct((N, M, C4), jnp.float32),
                   jax.ShapeDtypeStruct((N, 2, C4), jnp.float32)),
        grid_spec=pltpu.PrefetchScalarGridSpec(
            num_scalar_prefetch=0,
            grid=(N,),
            in_specs=[pl.BlockSpec((1, Hin + 2, Win + 2, Cin), lambda n: (n, 0, 0, 0)),
                      pl.BlockSpec((9 * Cin, C4), lambda n: (0, 0)),
                      pl.BlockSpec((1, C4), lambda n: (0, 0))],
            out_specs=(pl.BlockSpec((1, M, C4), lambda n: (n, 0, 0)),
                       pl.BlockSpec((1, 2, C4), lambda n: (n, 0, 0)))),
        compiler_params=pltpu.CompilerParams(dimension_semantics=("parallel",)),
    )(xp, w_cat, b_cat)

    # --- BatchNorm2d training-mode statistics (batch stats) from the per-batch partials ---
    cnt = float(N * H * W)
    s = stats.reshape(N, 2, 4, Cout).sum(axis=(0, 2))               # (2, Cout)
    mean = s[0] / cnt
    var = s[1] / cnt - mean * mean                                  # biased variance
    inv_std = jax.lax.rsqrt(var + eps)
    scale = gamma * inv_std
    shift = beta - mean * scale

    # Lane-dense flat view: (N, Hin*Win, 4*Cout) -> (N*Hin, Win*4*Cout); free metadata
    # reshape, last dim is a multiple of 128.
    rows = N * Hin
    lanes = Win * C4
    conv_flat = conv_out.reshape(rows, lanes)
    scale_flat = jnp.tile(scale, 4 * Win).reshape(1, lanes).astype(jnp.float32)
    shift_flat = jnp.tile(shift, 4 * Win).reshape(1, lanes).astype(jnp.float32)

    tr = rows                                                       # row-block size
    for cand in (512, 256, 128, 64, 32, 16, 8):
        if rows % cand == 0:
            tr = cand
            break

    # --- Pallas kernel 2: fused BN affine + ReLU, output aliased onto the conv buffer -----
    out_flat = pl.pallas_call(
        _bn_relu_kernel,
        out_shape=jax.ShapeDtypeStruct((rows, lanes), jnp.float32),
        grid_spec=pltpu.PrefetchScalarGridSpec(
            num_scalar_prefetch=0,
            grid=(rows // tr,),
            in_specs=[pl.BlockSpec((tr, lanes), lambda r: (r, 0)),
                      pl.BlockSpec((1, lanes), lambda r: (0, 0)),
                      pl.BlockSpec((1, lanes), lambda r: (0, 0))],
            out_specs=pl.BlockSpec((tr, lanes), lambda r: (r, 0))),
        compiler_params=pltpu.CompilerParams(dimension_semantics=("parallel",)),
        input_output_aliases={0: 0},
    )(conv_flat, scale_flat, shift_flat)

    # (n, i, j, a, b, cout) -> NCHW (n, cout, 2i+a, 2j+b): single boundary transpose.
    out = out_flat.reshape(N, Hin, Win, 2, 2, Cout)
    out = jnp.transpose(out, (0, 5, 1, 3, 2, 4)).reshape(N, Cout, H, W)
    return out


# ---------------------------------------------------------------------------
# References
# ---------------------------------------------------------------------------
def _reference_f32(x_nchw, params, eps=1e-5):
    """Faithful f32 reference of the PyTorch module."""
    w, b = params["w"], params["b"]
    gamma, beta = params["gamma"], params["beta"]
    x = jnp.transpose(x_nchw, (0, 2, 3, 1))
    x = jnp.repeat(jnp.repeat(x, 2, axis=1), 2, axis=2)             # nearest x2
    y = jax.lax.conv_general_dilated(
        x, jnp.transpose(w, (2, 3, 1, 0)), window_strides=(1, 1),
        padding=((1, 1), (1, 1)), dimension_numbers=("NHWC", "HWIO", "NHWC")) + b
    mean = jnp.mean(y, axis=(0, 1, 2))
    var = jnp.var(y, axis=(0, 1, 2))
    y = (y - mean) * jax.lax.rsqrt(var + eps) * gamma + beta
    return jnp.transpose(jnp.maximum(y, 0.0), (0, 3, 1, 2))


def _reference_matched(x_nchw, params, eps=1e-5):
    """Same algorithm as the Pallas path (bf16 inputs / folded weights, f32 accumulation),
    written in plain JAX -- tight numerical check of the kernels themselves."""
    w, b = params["w"], params["b"]
    gamma, beta = params["gamma"], params["beta"]
    N, Cin, Hin, Win = x_nchw.shape
    Cout = w.shape[0]
    xb = jnp.transpose(x_nchw, (0, 2, 3, 1)).astype(jnp.bfloat16)
    xpad = jnp.pad(xb, ((0, 0), (1, 1), (1, 1), (0, 0)))
    w_cat = _make_wcat(w).astype(jnp.bfloat16).astype(jnp.float32)
    cols = [xpad[:, kh:kh + Hin, kw:kw + Win, :].reshape(N, Hin * Win, Cin)
            for kh in range(3) for kw in range(3)]
    patches = jnp.concatenate(cols, axis=-1).astype(jnp.float32)    # (N, M, 9*Cin)
    y = jnp.einsum('nmk,kc->nmc', patches, w_cat) + jnp.tile(b, 4)  # (N, M, 4*Cout)
    yc = y.reshape(N, Hin * Win, 4, Cout)
    cnt = N * Hin * Win * 4
    mean = jnp.sum(yc, axis=(0, 1, 2)) / cnt
    var = jnp.sum(yc * yc, axis=(0, 1, 2)) / cnt - mean * mean
    scale = gamma * jax.lax.rsqrt(var + eps)
    shift = beta - mean * scale
    o = jnp.maximum(yc * scale + shift, 0.0)
    o = o.reshape(N, Hin, Win, 2, 2, Cout)
    return jnp.transpose(o, (0, 5, 1, 3, 2, 4)).reshape(N, Cout, 2 * Hin, 2 * Win)


if __name__ == "__main__":
    key = jax.random.PRNGKey(0)
    kx, kp = jax.random.split(key)
    ch_in, ch_out = 4, 8
    x = jax.random.normal(kx, (2, ch_in, 16, 16), jnp.float32)      # NCHW
    params = init_up_conv_params(kp, ch_in, ch_out)

    fwd = jax.jit(up_conv_forward)
    out = jax.block_until_ready(fwd(x, params))

    # Tight check vs. an identical-algorithm JAX implementation (same bf16 quantization).
    ref_tight = jax.block_until_ready(_reference_matched(x, params))
    np.testing.assert_allclose(np.asarray(out), np.asarray(ref_tight), rtol=1e-3, atol=1e-3)

    # Fidelity check vs. the faithful f32 PyTorch-equivalent forward (tolerance reflects
    # bf16 inputs/weights on the MXU).
    ref_f32 = jax.block_until_ready(_reference_f32(x, params))
    np.testing.assert_allclose(np.asarray(out), np.asarray(ref_f32), rtol=5e-2, atol=5e-2)

    print("KERNEL_OK")
</pallas_src>

<mosaic_0001>
module attributes {stable_mosaic.version = 11 : i64} {
  func.func @_upconv_matmul_kernel(%arg0: i32, %arg1: memref<1x18x18x4xbf16, #tpu.memory_space<vmem>>, %arg2: memref<36x32xbf16, #tpu.memory_space<vmem>>, %arg3: memref<1x32xf32, #tpu.memory_space<vmem>>, %arg4: memref<1x256x32xf32, #tpu.memory_space<vmem>>, %arg5: memref<1x2x32xf32, #tpu.memory_space<vmem>>) attributes {dimension_semantics = [#tpu.dimension_semantics<parallel>], iteration_bounds = array<i64: 2>, scalar_prefetch = 0 : i64, scratch_operands = 0 : i64, tpu.core_type = #tpu.core_type<tc>, window_params = [{transform_indices = @transform_0, window_bounds = array<i64: 1, 18, 18, 4>}, {pipeline_mode = #tpu.pipeline_mode<synchronous>, transform_indices = @transform_1, window_bounds = array<i64: 36, 32>}, {pipeline_mode = #tpu.pipeline_mode<synchronous>, transform_indices = @transform_2, window_bounds = array<i64: 1, 32>}, {transform_indices = @transform_3, window_bounds = array<i64: 1, 256, 32>}, {transform_indices = @transform_4, window_bounds = array<i64: 1, 2, 32>}]} {
    %c0 = arith.constant 0 : index
    %c0_0 = arith.constant 0 : index
    %c0_1 = arith.constant 0 : index
    %c0_2 = arith.constant 0 : index
    %0 = vector.load %arg1[%c0, %c0_0, %c0_1, %c0_2] : memref<1x18x18x4xbf16, #tpu.memory_space<vmem>>, vector<1x18x18x4xbf16>
    %1 = vector.extract_strided_slice %0 {offsets = [0, 0, 0, 0], sizes = [1, 16, 16, 4], strides = [1, 1, 1, 1]} : vector<1x18x18x4xbf16> to vector<1x16x16x4xbf16>
    %2 = vector.shape_cast %1 : vector<1x16x16x4xbf16> to vector<16x16x4xbf16>
    %3 = vector.shape_cast %2 : vector<16x16x4xbf16> to vector<256x4xbf16>
    %4 = vector.extract_strided_slice %0 {offsets = [0, 0, 1, 0], sizes = [1, 16, 16, 4], strides = [1, 1, 1, 1]} : vector<1x18x18x4xbf16> to vector<1x16x16x4xbf16>
    %5 = vector.shape_cast %4 : vector<1x16x16x4xbf16> to vector<16x16x4xbf16>
    %6 = vector.shape_cast %5 : vector<16x16x4xbf16> to vector<256x4xbf16>
    %7 = vector.extract_strided_slice %0 {offsets = [0, 0, 2, 0], sizes = [1, 16, 16, 4], strides = [1, 1, 1, 1]} : vector<1x18x18x4xbf16> to vector<1x16x16x4xbf16>
    %8 = vector.shape_cast %7 : vector<1x16x16x4xbf16> to vector<16x16x4xbf16>
    %9 = vector.shape_cast %8 : vector<16x16x4xbf16> to vector<256x4xbf16>
    %10 = vector.extract_strided_slice %0 {offsets = [0, 1, 0, 0], sizes = [1, 16, 16, 4], strides = [1, 1, 1, 1]} : vector<1x18x18x4xbf16> to vector<1x16x16x4xbf16>
    %11 = vector.shape_cast %10 : vector<1x16x16x4xbf16> to vector<16x16x4xbf16>
    %12 = vector.shape_cast %11 : vector<16x16x4xbf16> to vector<256x4xbf16>
    %13 = vector.extract_strided_slice %0 {offsets = [0, 1, 1, 0], sizes = [1, 16, 16, 4], strides = [1, 1, 1, 1]} : vector<1x18x18x4xbf16> to vector<1x16x16x4xbf16>
    %14 = vector.shape_cast %13 : vector<1x16x16x4xbf16> to vector<16x16x4xbf16>
    %15 = vector.shape_cast %14 : vector<16x16x4xbf16> to vector<256x4xbf16>
    %16 = vector.extract_strided_slice %0 {offsets = [0, 1, 2, 0], sizes = [1, 16, 16, 4], strides = [1, 1, 1, 1]} : vector<1x18x18x4xbf16> to vector<1x16x16x4xbf16>
    %17 = vector.shape_cast %16 : vector<1x16x16x4xbf16> to vector<16x16x4xbf16>
    %18 = vector.shape_cast %17 : vector<16x16x4xbf16> to vector<256x4xbf16>
    %19 = vector.extract_strided_slice %0 {offsets = [0, 2, 0, 0], sizes = [1, 16, 16, 4], strides = [1, 1, 1, 1]} : vector<1x18x18x4xbf16> to vector<1x16x16x4xbf16>
    %20 = vector.shape_cast %19 : vector<1x16x16x4xbf16> to vector<16x16x4xbf16>
    %21 = vector.shape_cast %20 : vector<16x16x4xbf16> to vector<256x4xbf16>
    %22 = vector.extract_strided_slice %0 {offsets = [0, 2, 1, 0], sizes = [1, 16, 16, 4], strides = [1, 1, 1, 1]} : vector<1x18x18x4xbf16> to vector<1x16x16x4xbf16>
    %23 = vector.shape_cast %22 : vector<1x16x16x4xbf16> to vector<16x16x4xbf16>
    %24 = vector.shape_cast %23 : vector<16x16x4xbf16> to vector<256x4xbf16>
    %25 = vector.extract_strided_slice %0 {offsets = [0, 2, 2, 0], sizes = [1, 16, 16, 4], strides = [1, 1, 1, 1]} : vector<1x18x18x4xbf16> to vector<1x16x16x4xbf16>
    %26 = vector.shape_cast %25 : vector<1x16x16x4xbf16> to vector<16x16x4xbf16>
    %27 = vector.shape_cast %26 : vector<16x16x4xbf16> to vector<256x4xbf16>
    %28 = tpu.concatenate %3, %6, %9, %12, %15, %18, %21, %24, %27 in 1 : vector<256x4xbf16>, vector<256x4xbf16>, vector<256x4xbf16>, vector<256x4xbf16>, vector<256x4xbf16>, vector<256x4xbf16>, vector<256x4xbf16>, vector<256x4xbf16>, vector<256x4xbf16> -> vector<256x36xbf16>
    %c0_3 = arith.constant 0 : index
    %c0_4 = arith.constant 0 : index
    %29 = vector.load %arg2[%c0_3, %c0_4] : memref<36x32xbf16, #tpu.memory_space<vmem>>, vector<36x32xbf16>
    %cst = arith.constant dense<0.000000e+00> : vector<256x32xf32>
    %30 = tpu.matmul %28, %29, %cst {dimension_numbers = #tpu.dot_dimension_numbers<[1], [0], [0], [1], [0, 0, 1, 1], [], []>} : vector<256x36xbf16>, vector<36x32xbf16>, vector<256x32xf32> -> vector<256x32xf32>
    %c0_5 = arith.constant 0 : index
    %c0_6 = arith.constant 0 : index
    %31 = vector.load %arg3[%c0_5, %c0_6] : memref<1x32xf32, #tpu.memory_space<vmem>>, vector<1x32xf32>
    %32 = vector.broadcast %31 : vector<1x32xf32> to vector<256x32xf32>
    %33 = arith.addf %30, %32 : vector<256x32xf32>
    %34 = vector.shape_cast %33 : vector<256x32xf32> to vector<1x256x32xf32>
    %c0_7 = arith.constant 0 : index
    %c0_8 = arith.constant 0 : index
    %c0_9 = arith.constant 0 : index
    %35 = vector.load %arg4[%c0_7, %c0_8, %c0_9] : memref<1x256x32xf32, #tpu.memory_space<vmem>>, vector<1x256x32xf32>
    tpu.vector_store %arg4[%c0_7, %c0_8, %c0_9], %34 {strides = array<i32>} : memref<1x256x32xf32, #tpu.memory_space<vmem>>, vector<1x256x32xf32>,
    %cst_10 = arith.constant dense<0.000000e+00> : vector<32xf32>
    %36 = vector.multi_reduction <add>, %33, %cst_10 [0] : vector<256x32xf32> to vector<32xf32>
    %37 = vector.shape_cast %36 : vector<32xf32> to vector<1x32xf32>
    %38 = vector.shape_cast %37 : vector<1x32xf32> to vector<1x1x32xf32>
    %c0_11 = arith.constant 0 : index
    %c0_12 = arith.constant 0 : index
    %c0_13 = arith.constant 0 : index
    %39 = vector.load %arg5[%c0_11, %c0_12, %c0_13] : memref<1x2x32xf32, #tpu.memory_space<vmem>>, vector<1x1x32xf32>
    tpu.vector_store %arg5[%c0_11, %c0_12, %c0_13], %38 {strides = array<i32>} : memref<1x2x32xf32, #tpu.memory_space<vmem>>, vector<1x1x32xf32>,
    %40 = arith.mulf %33, %33 : vector<256x32xf32>
    %cst_14 = arith.constant dense<0.000000e+00> : vector<32xf32>
    %41 = vector.multi_reduction <add>, %40, %cst_14 [0] : vector<256x32xf32> to vector<32xf32>
    %42 = vector.shape_cast %41 : vector<32xf32> to vector<1x32xf32>
    %43 = vector.shape_cast %42 : vector<1x32xf32> to vector<1x1x32xf32>
    %c0_15 = arith.constant 0 : index
    %c1 = arith.constant 1 : index
    %c0_16 = arith.constant 0 : index
    %44 = vector.load %arg5[%c0_15, %c1, %c0_16] : memref<1x2x32xf32, #tpu.memory_space<vmem>>, vector<1x1x32xf32>
    tpu.vector_store %arg5[%c0_15, %c1, %c0_16], %43 {strides = array<i32>} : memref<1x2x32xf32, #tpu.memory_space<vmem>>, vector<1x1x32xf32>,
    return
  }
  func.func @transform_0(%arg0: i32) -> (i32, i32, i32, i32) {
    %c0_i32 = arith.constant 0 : i32
    %c0_i32_0 = arith.constant 0 : i32
    %c0_i32_1 = arith.constant 0 : i32
    %c0_i32_2 = arith.constant 0 : i32
    return %arg0, %c0_i32, %c0_i32_0, %c0_i32_1 : i32, i32, i32, i32
  }
  func.func @transform_1(%arg0: i32) -> (i32, i32) {
    %c0_i32 = arith.constant 0 : i32
    %c0_i32_0 = arith.constant 0 : i32
    %c0_i32_1 = arith.constant 0 : i32
    return %c0_i32, %c0_i32_0 : i32, i32
  }
  func.func @transform_2(%arg0: i32) -> (i32, i32) {
    %c0_i32 = arith.constant 0 : i32
    %c0_i32_0 = arith.constant 0 : i32
    %c0_i32_1 = arith.constant 0 : i32
    return %c0_i32, %c0_i32_0 : i32, i32
  }
  func.func @transform_3(%arg0: i32) -> (i32, i32, i32) {
    %c0_i32 = arith.constant 0 : i32
    %c0_i32_0 = arith.constant 0 : i32
    %c0_i32_1 = arith.constant 0 : i32
    return %arg0, %c0_i32, %c0_i32_0 : i32, i32, i32
  }
  func.func @transform_4(%arg0: i32) -> (i32, i32, i32) {
    %c0_i32 = arith.constant 0 : i32
    %c0_i32_0 = arith.constant 0 : i32
    %c0_i32_1 = arith.constant 0 : i32
    return %arg0, %c0_i32, %c0_i32_0 : i32, i32, i32
  }
}

module attributes {stable_mosaic.version = 11 : i64} {
  func.func @_bn_relu_kernel(%arg0: i32, %arg1: memref<32x512xf32, #tpu.memory_space<vmem>>, %arg2: memref<1x512xf32, #tpu.memory_space<vmem>>, %arg3: memref<1x512xf32, #tpu.memory_space<vmem>>, %arg4: memref<32x512xf32, #tpu.memory_space<vmem>>) attributes {dimension_semantics = [#tpu.dimension_semantics<parallel>], iteration_bounds = array<i64: 1>, scalar_prefetch = 0 : i64, scratch_operands = 0 : i64, tpu.core_type = #tpu.core_type<tc>, window_params = [{transform_indices = @transform_0, window_bounds = array<i64: 32, 512>}, {pipeline_mode = #tpu.pipeline_mode<synchronous>, transform_indices = @transform_1, window_bounds = array<i64: 1, 512>}, {pipeline_mode = #tpu.pipeline_mode<synchronous>, transform_indices = @transform_2, window_bounds = array<i64: 1, 512>}, {transform_indices = @transform_3, window_bounds = array<i64: 32, 512>}]} {
    %c0 = arith.constant 0 : index
    %c0_0 = arith.constant 0 : index
    %0 = vector.load %arg1[%c0, %c0_0] : memref<32x512xf32, #tpu.memory_space<vmem>>, vector<32x512xf32>
    %c0_1 = arith.constant 0 : index
    %c0_2 = arith.constant 0 : index
    %1 = vector.load %arg2[%c0_1, %c0_2] : memref<1x512xf32, #tpu.memory_space<vmem>>, vector<1x512xf32>
    %2 = vector.broadcast %1 : vector<1x512xf32> to vector<32x512xf32>
    %3 = arith.mulf %0, %2 : vector<32x512xf32>
    %c0_3 = arith.constant 0 : index
    %c0_4 = arith.constant 0 : index
    %4 = vector.load %arg3[%c0_3, %c0_4] : memref<1x512xf32, #tpu.memory_space<vmem>>, vector<1x512xf32>
    %5 = vector.broadcast %4 : vector<1x512xf32> to vector<32x512xf32>
    %6 = arith.addf %3, %5 : vector<32x512xf32>
    %cst = arith.constant 0.000000e+00 : f32
    %7 = vector.broadcast %cst : f32 to vector<32x512xf32>
    %8 = arith.maximumf %6, %7 : vector<32x512xf32>
    %c0_5 = arith.constant 0 : index
    %c0_6 = arith.constant 0 : index
    %9 = vector.load %arg4[%c0_5, %c0_6] : memref<32x512xf32, #tpu.memory_space<vmem>>, vector<32x512xf32>
    tpu.vector_store %arg4[%c0_5, %c0_6], %8 {strides = array<i32>} : memref<32x512xf32, #tpu.memory_space<vmem>>, vector<32x512xf32>,
    return
  }
  func.func @transform_0(%arg0: i32) -> (i32, i32) {
    %c0_i32 = arith.constant 0 : i32
    %c0_i32_0 = arith.constant 0 : i32
    return %arg0, %c0_i32 : i32, i32
  }
  func.func @transform_1(%arg0: i32) -> (i32, i32) {
    %c0_i32 = arith.constant 0 : i32
    %c0_i32_0 = arith.constant 0 : i32
    %c0_i32_1 = arith.constant 0 : i32
    return %c0_i32, %c0_i32_0 : i32, i32
  }
  func.func @transform_2(%arg0: i32) -> (i32, i32) {
    %c0_i32 = arith.constant 0 : i32
    %c0_i32_0 = arith.constant 0 : i32
    %c0_i32_1 = arith.constant 0 : i32
    return %c0_i32, %c0_i32_0 : i32, i32
  }
  func.func @transform_3(%arg0: i32) -> (i32, i32) {
    %c0_i32 = arith.constant 0 : i32
    %c0_i32_0 = arith.constant 0 : i32
    return %arg0, %c0_i32 : i32, i32
  }
}

</mosaic_0001>

<llo_original>
// kernel: tile.18
$region0: #{tile.18}
  #allocation0 [shape = 's32[1]{0}', space=sflag, size = 0x4, scoped, tag = 'scoped memory for tile.18']
  %s0 = inlined_call_operand.vmem [shape: f32[8], index: 0, kind: input, shape index: {}]
  %s1 = inlined_call_operand.vmem [shape: f32[4,8], index: 1, kind: output, shape index: {}]
  // Predicated region
  $region2: #{tile.18} parent=0 // pred_check
    _
  $region3: #{tile.18} parent=0 // pred_check_branch
    %3 = sbr.rel (0) target = $region5
  $region4: #{tile.18} parent=0 // pred_region
    _
  $region5: #{tile.18} parent=0 // pred_fallthru
    _
  %v4 = vld [vmem:[%s0] ss:$0 sm:$0xff]
  %5 = vst [vmem:[%s1] sm:$0xf] %v4

// kernel: tile.19
$region0: #{tile.19}
  %s0 = inlined_call_operand.vmem [shape: f32[4,8], index: 0, kind: input, shape index: {}]
  %s1 = inlined_call_operand.vmem [shape: f32[1,32], index: 1, kind: output, shape index: {}]
  $region1: #{tile.19} parent=0
    #allocation0 [shape = 'u8[4096]{0}', space=vmem, size = 0x1000, scoped, tag = 'scoped mem for output reshape']
    #allocation1 [shape = 'u8[4096]{0}', space=vmem, size = 0x1000, scoped, tag = 'scoped mem for input reshape']
    %s3 = sshll.u32 1, 4
    %s4 = ssub.s32 %s3, 1
    %v5 = vld [vmem:[%s0] sm:%s4]
    %6 = vst [vmem:[#allocation1] sm:%s4] %v5
    %v7 = vld [vmem:[#allocation1] sm:$0x1]
    %vm8 = vcmask 64512
    %9 = vst.msk [vmem:[#allocation0] sm:$0x1] %vm8, %v7
    %s10 = scalar_lea.vmem [#allocation1], 3
    %v11 = vld [vmem:[%s10] sm:$0x1]
    %12 = vrot.lane.b32.xlu0 %v11, 24
    %v13 = vpop.permute.xlu0 %12
    %vm14 = vcmask 261312
    %15 = vst.msk [vmem:[#allocation0] sm:$0x1] %vm14, %v13
    %s16 = scalar_lea.vmem [#allocation1], 2
    %v17 = vld [vmem:[%s16] sm:$0x1]
    %18 = vrot.lane.b32.xlu0 %v17, 16
    %v19 = vpop.permute.xlu0 %18
    %vm20 = vcmask 195712
    %21 = vst.msk [vmem:[#allocation0] sm:$0x1] %vm20, %v19
    %s22 = scalar_lea.vmem [#allocation1], 1
    %v23 = vld [vmem:[%s22] sm:$0x1]
    %24 = vrot.lane.b32.xlu0 %v23, 8
    %v25 = vpop.permute.xlu0 %24
    %vm26 = vcmask 130112
    %27 = vst.msk [vmem:[#allocation0] sm:$0x1] %vm26, %v25
    %s29 = sshll.u32 1, 1
    %s30 = ssub.s32 %s29, 1
    %v32 = vld [vmem:[#allocation0] sm:%s30]
    %s33 = sshll.u32 1, 1
    %s34 = ssub.s32 %s33, 1
    %35 = vst [vmem:[%s1] sm:%s34] %v32

// kernel: tile.28
$region0: #{tile.28}
  #allocation0 [shape = 's32[1]{0}', space=sflag, size = 0x4, scoped, tag = 'scoped memory for tile.28']
  %s0 = inlined_call_operand.vmem [shape: f32[8], index: 0, kind: input, shape index: {}]
  %s1 = inlined_call_operand.vmem [shape: f32[64,8], index: 1, kind: output, shape index: {}]
  // Predicated region
  $region2: #{tile.28} parent=0 // pred_check
    _
  $region3: #{tile.28} parent=0 // pred_check_branch
    %3 = sbr.rel (0) target = $region5
  $region4: #{tile.28} parent=0 // pred_region
    _
  $region5: #{tile.28} parent=0 // pred_fallthru
    _
  %v4 = vld [vmem:[%s0] ss:$0 sm:$0xff]
  %5 = vst [vmem:[%s1] sm:$0xff] %v4
  %s6 = scalar_lea.vmem %s1, 8
  %7 = vst [vmem:[%s6] sm:$0xff] %v4
  %s8 = scalar_lea.vmem %s1, 16
  %9 = vst [vmem:[%s8] sm:$0xff] %v4
  %s10 = scalar_lea.vmem %s1, 24
  %11 = vst [vmem:[%s10] sm:$0xff] %v4
  %s12 = scalar_lea.vmem %s1, 32
  %13 = vst [vmem:[%s12] sm:$0xff] %v4
  %s14 = scalar_lea.vmem %s1, 40
  %15 = vst [vmem:[%s14] sm:$0xff] %v4
  %s16 = scalar_lea.vmem %s1, 48
  %17 = vst [vmem:[%s16] sm:$0xff] %v4
  %s18 = scalar_lea.vmem %s1, 56
  %19 = vst [vmem:[%s18] sm:$0xff] %v4

// kernel: tile.29
$region0: #{tile.29}
  %s0 = inlined_call_operand.vmem [shape: f32[64,8], index: 0, kind: input, shape index: {}]
  %s1 = inlined_call_operand.vmem [shape: f32[1,512], index: 1, kind: output, shape index: {}]
  $region1: #{tile.29} parent=0
    #allocation0 [shape = 'u8[16384]{0}', space=vmem, size = 0x4000, scoped, tag = 'scoped mem for output reshape']
    %s2 = smov 3
    %v3 = vld [vmem:[%s0] ss:$16 sm:%s2]
    %s4 = smov 12
    %v5 = vld [vmem:[%s0] ss:$16 sm:%s4]
    %vm6 = vcmask 1043458
    %v7 = vsel %vm6, %v5, %v3
    %vm8 = vcmask 64512
    %9 = vst.msk [vmem:[#allocation0] ss:$8 sm:$0xf] %vm8, %v7
    %s10 = scalar_lea.vmem %s0, 15
    %s11 = smov 3
    %v12 = vld [vmem:[%s10] ss:$16 sm:%s11]
    %s13 = scalar_lea.vmem %s0, 15
    %s14 = smov 12
    %v15 = vld [vmem:[%s13] ss:$16 sm:%s14]
    %vm16 = vcmask 1043458
    %v17 = vsel %vm16, %v15, %v12
    %18 = vrot.lane.b32.xlu0 %v17, 120
    %v19 = vpop.permute.xlu0 %18
    %vm20 = vcmask 1048512
    %21 = vst.msk [vmem:[#allocation0] ss:$8 sm:$0xf] %vm20, %v19
    %s22 = scalar_lea.vmem %s0, 14
    %s23 = smov 3
    %v24 = vld [vmem:[%s22] ss:$16 sm:%s23]
    %s25 = scalar_lea.vmem %s0, 14
    %s26 = smov 12
    %v27 = vld [vmem:[%s25] ss:$16 sm:%s26]
    %vm28 = vcmask 1043458
    %v29 = vsel %vm28, %v27, %v24
    %30 = vrot.lane.b32.xlu0 %v29, 112
    %v31 = vpop.permute.xlu0 %30
    %vm32 = vcmask 982912
    %33 = vst.msk [vmem:[#allocation0] ss:$8 sm:$0xf] %vm32, %v31
    %s34 = scalar_lea.vmem %s0, 13
    %s35 = smov 3
    %v36 = vld [vmem:[%s34] ss:$16 sm:%s35]
    %s37 = scalar_lea.vmem %s0, 13
    %s38 = smov 12
    %v39 = vld [vmem:[%s37] ss:$16 sm:%s38]
    %vm40 = vcmask 1043458
    %v41 = vsel %vm40, %v39, %v36
    %42 = vrot.lane.b32.xlu0 %v41, 104
    %v43 = vpop.permute.xlu0 %42
    %vm44 = vcmask 917312
    %45 = vst.msk [vmem:[#allocation0] ss:$8 sm:$0xf] %vm44, %v43
    %s46 = scalar_lea.vmem %s0, 12
    %s47 = smov 3
    %v48 = vld [vmem:[%s46] ss:$16 sm:%s47]
    %s49 = scalar_lea.vmem %s0, 12
    %s50 = smov 12
    %v51 = vld [vmem:[%s49] ss:$16 sm:%s50]
    %vm52 = vcmask 1043458
    %v53 = vsel %vm52, %v51, %v48
    %54 = vrot.lane.b32.xlu0 %v53, 96
    %v55 = vpop.permute.xlu0 %54
    %vm56 = vcmask 851712
    %57 = vst.msk [vmem:[#allocation0] ss:$8 sm:$0xf] %vm56, %v55
    %s58 = scalar_lea.vmem %s0, 11
    %s59 = smov 3
    %v60 = vld [vmem:[%s58] ss:$16 sm:%s59]
    %s61 = scalar_lea.vmem %s0, 11
    %s62 = smov 12
    %v63 = vld [vmem:[%s61] ss:$16 sm:%s62]
    %vm64 = vcmask 1043458
    %v65 = vsel %vm64, %v63, %v60
    %66 = vrot.lane.b32.xlu0 %v65, 88
    %v67 = vpop.permute.xlu0 %66
    %vm68 = vcmask 786112
    %69 = vst.msk [vmem:[#allocation0] ss:$8 sm:$0xf] %vm68, %v67
    %s70 = scalar_lea.vmem %s0, 10
    %s71 = smov 3
    %v72 = vld [vmem:[%s70] ss:$16 sm:%s71]
    %s73 = scalar_lea.vmem %s0, 10
    %s74 = smov 12
    %v75 = vld [vmem:[%s73] ss:$16 sm:%s74]
    %vm76 = vcmask 1043458
    %v77 = vsel %vm76, %v75, %v72
    %78 = vrot.lane.b32.xlu0 %v77, 80
    %v79 = vpop.permute.xlu0 %78
    %vm80 = vcmask 720512
    %81 = vst.msk [vmem:[#allocation0] ss:$8 sm:$0xf] %vm80, %v79
    %s82 = scalar_lea.vmem %s0, 9
    %s83 = smov 3
    %v84 = vld [vmem:[%s82] ss:$16 sm:%s83]
    %s85 = scalar_lea.vmem %s0, 9
    %s86 = smov 12
    %v87 = vld [vmem:[%s85] ss:$16 sm:%s86]
    %vm88 = vcmask 1043458
    %v89 = vsel %vm88, %v87, %v84
    %90 = vrot.lane.b32.xlu0 %v89, 72
    %v91 = vpop.permute.xlu0 %90
    %vm92 = vcmask 654912
    %93 = vst.msk [vmem:[#allocation0] ss:$8 sm:$0xf] %vm92, %v91
    %s94 = scalar_lea.vmem %s0, 8
    %s95 = smov 3
    %v96 = vld [vmem:[%s94] ss:$16 sm:%s95]
    %s97 = scalar_lea.vmem %s0, 8
    %s98 = smov 12
    %v99 = vld [vmem:[%s97] ss:$16 sm:%s98]
    %vm100 = vcmask 1043458
    %v101 = vsel %vm100, %v99, %v96
    %102 = vrot.lane.b32.xlu0 %v101, 64
    %v103 = vpop.permute.xlu0 %102
    %vm104 = vcmask 589312
    %105 = vst.msk [vmem:[#allocation0] ss:$8 sm:$0xf] %vm104, %v103
    %s106 = scalar_lea.vmem %s0, 7
    %s107 = smov 3
    %v108 = vld [vmem:[%s106] ss:$16 sm:%s107]
    %s109 = scalar_lea.vmem %s0, 7
    %s110 = smov 12
    %v111 = vld [vmem:[%s109] ss:$16 sm:%s110]
    %vm112 = vcmask 1043458
    %v113 = vsel %vm112, %v111, %v108
    %114 = vrot.lane.b32.xlu0 %v113, 56
    %v115 = vpop.permute.xlu0 %114
    %vm116 = vcmask 523712
    %117 = vst.msk [vmem:[#allocation0] ss:$8 sm:$0xf] %vm116, %v115
    %s118 = scalar_lea.vmem %s0, 6
    %s119 = smov 3
    %v120 = vld [vmem:[%s118] ss:$16 sm:%s119]
    %s121 = scalar_lea.vmem %s0, 6
    %s122 = smov 12
    %v123 = vld [vmem:[%s121] ss:$16 sm:%s122]
    %vm124 = vcmask 1043458
    %v125 = vsel %vm124, %v123, %v120
    %126 = vrot.lane.b32.xlu0 %v125, 48
    %v127 = vpop.permute.xlu0 %126
    %vm128 = vcmask 458112
    %129 = vst.msk [vmem:[#allocation0] ss:$8 sm:$0xf] %vm128, %v127
    %s130 = scalar_lea.vmem %s0, 5
    %s131 = smov 3
    %v132 = vld [vmem:[%s130] ss:$16 sm:%s131]
    %s133 = scalar_lea.vmem %s0, 5
    %s134 = smov 12
    %v135 = vld [vmem:[%s133] ss:$16 sm:%s134]
    %vm136 = vcmask 1043458
    %v137 = vsel %vm136, %v135, %v132
    %138 = vrot.lane.b32.xlu0 %v137, 40
    %v139 = vpop.permute.xlu0 %138
    %vm140 = vcmask 392512
    %141 = vst.msk [vmem:[#allocation0] ss:$8 sm:$0xf] %vm140, %v139
    %s142 = scalar_lea.vmem %s0, 4
    %s143 = smov 3
    %v144 = vld [vmem:[%s142] ss:$16 sm:%s143]
    %s145 = scalar_lea.vmem %s0, 4
    %s146 = smov 12
    %v147 = vld [vmem:[%s145] ss:$16 sm:%s146]
    %vm148 = vcmask 1043458
    %v149 = vsel %vm148, %v147, %v144
    %150 = vrot.lane.b32.xlu0 %v149, 32
    %v151 = vpop.permute.xlu0 %150
    %vm152 = vcmask 326912
    %153 = vst.msk [vmem:[#allocation0] ss:$8 sm:$0xf] %vm152, %v151
    %s154 = scalar_lea.vmem %s0, 3
    %s155 = smov 3
    %v156 = vld [vmem:[%s154] ss:$16 sm:%s155]
    %s157 = scalar_lea.vmem %s0, 3
    %s158 = smov 12
    %v159 = vld [vmem:[%s157] ss:$16 sm:%s158]
    %vm160 = vcmask 1043458
    %v161 = vsel %vm160, %v159, %v156
    %162 = vrot.lane.b32.xlu0 %v161, 24
    %v163 = vpop.permute.xlu0 %162
    %vm164 = vcmask 261312
    %165 = vst.msk [vmem:[#allocation0] ss:$8 sm:$0xf] %vm164, %v163
    %s166 = scalar_lea.vmem %s0, 2
    %s167 = smov 3
    %v168 = vld [vmem:[%s166] ss:$16 sm:%s167]
    %s169 = scalar_lea.vmem %s0, 2
    %s170 = smov 12
    %v171 = vld [vmem:[%s169] ss:$16 sm:%s170]
    %vm172 = vcmask 1043458
    %v173 = vsel %vm172, %v171, %v168
    %174 = vrot.lane.b32.xlu0 %v173, 16
    %v175 = vpop.permute.xlu0 %174
    %vm176 = vcmask 195712
    %177 = vst.msk [vmem:[#allocation0] ss:$8 sm:$0xf] %vm176, %v175
    %s178 = scalar_lea.vmem %s0, 1
    %s179 = smov 3
    %v180 = vld [vmem:[%s178] ss:$16 sm:%s179]
    %s181 = scalar_lea.vmem %s0, 1
    %s182 = smov 12
    %v183 = vld [vmem:[%s181] ss:$16 sm:%s182]
    %vm184 = vcmask 1043458
    %v185 = vsel %vm184, %v183, %v180
    %186 = vrot.lane.b32.xlu0 %v185, 8
    %v187 = vpop.permute.xlu0 %186
    %vm188 = vcmask 130112
    %189 = vst.msk [vmem:[#allocation0] ss:$8 sm:$0xf] %vm188, %v187
    %s191 = sshll.u32 1, 1
    %s192 = ssub.s32 %s191, 1
    %v194 = vld [vmem:[#allocation0] sm:%s192]
    %s195 = sshll.u32 1, 1
    %s196 = ssub.s32 %s195, 1
    %197 = vst [vmem:[%s1] sm:%s196] %v194
    %s198 = scalar_lea.vmem [#allocation0], 8
    %v199 = vld [vmem:[%s198] sm:%s192]
    %s200 = sshll.u32 1, 1
    %s201 = ssub.s32 %s200, 1
    %s202 = scalar_lea.vmem %s1, 1
    %203 = vst [vmem:[%s202] sm:%s201] %v199
    %s204 = scalar_lea.vmem [#allocation0], 16
    %v205 = vld [vmem:[%s204] sm:%s192]
    %s206 = sshll.u32 1, 1
    %s207 = ssub.s32 %s206, 1
    %s208 = smul.addr 1, 2
    %s209 = scalar_lea.vmem %s1, %s208
    %210 = vst [vmem:[%s209] sm:%s207] %v205
    %s211 = scalar_lea.vmem [#allocation0], 24
    %v212 = vld [vmem:[%s211] sm:%s192]
    %s213 = sshll.u32 1, 1
    %s214 = ssub.s32 %s213, 1
    %s215 = smul.addr 1, 3
    %s216 = scalar_lea.vmem %s1, %s215
    %217 = vst [vmem:[%s216] sm:%s214] %v212

// kernel: up_conv_forward.3
$region0: #{up_conv_forward.3}
  #allocation0 [shape = 'u32[]', space=smem, size = 0x4, offset = 0x4, fixed_abs, tag = 'smem constant byte address 0x4 - core index']
  #allocation1 [shape = 'u32[144,128]{1,0:T(1,128)}', space=vmem, size = 0x12000, scoped, tag = 'internal scratch']
  %s0 = inlined_call_operand.vmem [shape: f32[32,512], index: 0, kind: input, shape index: {}, may-alias: {0,3}]
  %s1 = inlined_call_operand.vmem [shape: f32[1,512], index: 1, kind: input, shape index: {}]
  %s2 = inlined_call_operand.vmem [shape: f32[1,512], index: 2, kind: input, shape index: {}]
  %s3 = inlined_call_operand.vmem [shape: f32[32,512], index: 3, kind: output, shape index: {}, may-alias: {0,3}]
  %s4 = sld [smem:[#allocation0]]
  $region22: #{up_conv_forward.3} parent=0
    _
  %s6 = ssub.s32 1, %s4
  %s7 = scalar_select 0, %s6, %s4
  // Predicated region
  $region2: #{up_conv_forward.3} parent=0 // pred_check
    _
  $region3: #{up_conv_forward.3} parent=0 // pred_check_branch
    %9 = sbr.rel (0) target = $region5
  $region4: #{up_conv_forward.3} parent=0 // pred_region
    _
  $region5: #{up_conv_forward.3} parent=0 // pred_fallthru
    _
  // Predicated region
  $region6: #{up_conv_forward.3} parent=0 // pred_check
    _
  $region7: #{up_conv_forward.3} parent=0 // pred_check_branch
    %11 = sbr.rel (0) target = $region9
  $region8: #{up_conv_forward.3} parent=0 // pred_region
    _
  $region9: #{up_conv_forward.3} parent=0 // pred_fallthru
    _
  // Predicated region
  $region10: #{up_conv_forward.3} parent=0 // pred_check
    _
  $region11: #{up_conv_forward.3} parent=0 // pred_check_branch
    %13 = sbr.rel (0) target = $region13
  $region12: #{up_conv_forward.3} parent=0 // pred_region
    _
  $region13: #{up_conv_forward.3} parent=0 // pred_fallthru
    _
  %v14 = vld [vmem:[%s0] sm:$0xff]
  %v15 = vld [vmem:[%s0 + $0x8] sm:$0xff]
  %v16 = vld [vmem:[%s0 + $0x10] sm:$0xff]
  %v17 = vld [vmem:[%s0 + $0x18] sm:$0xff]
  %v18 = vld [vmem:[%s0 + $0x20] sm:$0xff]
  %v19 = vld [vmem:[%s0 + $0x28] sm:$0xff]
  %v20 = vld [vmem:[%s0 + $0x30] sm:$0xff]
  %v21 = vld [vmem:[%s0 + $0x38] sm:$0xff]
  %v22 = vld [vmem:[%s0 + $0x40] sm:$0xff]
  %v23 = vld [vmem:[%s0 + $0x48] sm:$0xff]
  %v24 = vld [vmem:[%s0 + $0x50] sm:$0xff]
  %v25 = vld [vmem:[%s0 + $0x58] sm:$0xff]
  %v26 = vld [vmem:[%s0 + $0x60] sm:$0xff]
  %v27 = vld [vmem:[%s0 + $0x68] sm:$0xff]
  %v28 = vld [vmem:[%s0 + $0x70] sm:$0xff]
  %v29 = vld [vmem:[%s0 + $0x78] sm:$0xff]
  %v30 = vld [vmem:[%s1] sm:$0xf]
  %v32 = vlaneseq
  %v33 = vshrl.u32 %v32, 7
  %v34 = vsub.s32 0, %v33
  %v35 = vrot.slane %v30, %v34
  %v36 = vlaneseq
  %v37 = vshrl.u32 %v36, 7
  %v38 = vsub.s32 1, %v37
  %v39 = vrot.slane %v30, %v38
  %v40 = vlaneseq
  %v41 = vshrl.u32 %v40, 7
  %v42 = vsub.s32 2, %v41
  %v43 = vrot.slane %v30, %v42
  %v44 = vlaneseq
  %v45 = vshrl.u32 %v44, 7
  %v46 = vsub.s32 3, %v45
  %v47 = vrot.slane %v30, %v46
  %v52 = vmul.f32 %v14, %v35
  %v53 = vmul.f32 %v15, %v39
  %v54 = vmul.f32 %v16, %v43
  %v55 = vmul.f32 %v17, %v47
  %v56 = vmul.f32 %v18, %v35
  %v57 = vmul.f32 %v19, %v39
  %v58 = vmul.f32 %v20, %v43
  %v59 = vmul.f32 %v21, %v47
  %v60 = vmul.f32 %v22, %v35
  %v61 = vmul.f32 %v23, %v39
  %v62 = vmul.f32 %v24, %v43
  %v63 = vmul.f32 %v25, %v47
  %v64 = vmul.f32 %v26, %v35
  %v65 = vmul.f32 %v27, %v39
  %v66 = vmul.f32 %v28, %v43
  %v67 = vmul.f32 %v29, %v47
  %v68 = vld [vmem:[%s2] sm:$0xf]
  %v70 = vlaneseq
  %v71 = vshrl.u32 %v70, 7
  %v72 = vsub.s32 0, %v71
  %v73 = vrot.slane %v68, %v72
  %v74 = vlaneseq
  %v75 = vshrl.u32 %v74, 7
  %v76 = vsub.s32 1, %v75
  %v77 = vrot.slane %v68, %v76
  %v78 = vlaneseq
  %v79 = vshrl.u32 %v78, 7
  %v80 = vsub.s32 2, %v79
  %v81 = vrot.slane %v68, %v80
  %v82 = vlaneseq
  %v83 = vshrl.u32 %v82, 7
  %v84 = vsub.s32 3, %v83
  %v85 = vrot.slane %v68, %v84
  %v90 = vadd.f32 %v52, %v73
  %v91 = vadd.f32 %v53, %v77
  %v92 = vadd.f32 %v54, %v81
  %v93 = vadd.f32 %v55, %v85
  %v94 = vadd.f32 %v56, %v73
  %v95 = vadd.f32 %v57, %v77
  %v96 = vadd.f32 %v58, %v81
  %v97 = vadd.f32 %v59, %v85
  %v98 = vadd.f32 %v60, %v73
  %v99 = vadd.f32 %v61, %v77
  %v100 = vadd.f32 %v62, %v81
  %v101 = vadd.f32 %v63, %v85
  %v102 = vadd.f32 %v64, %v73
  %v103 = vadd.f32 %v65, %v77
  %v104 = vadd.f32 %v66, %v81
  %v105 = vadd.f32 %v67, %v85
  %v106 = vmax.f32 %v90, 0.0
  %v107 = vmax.f32 %v91, 0.0
  %v108 = vmax.f32 %v92, 0.0
  %v109 = vmax.f32 %v93, 0.0
  %v110 = vmax.f32 %v94, 0.0
  %v111 = vmax.f32 %v95, 0.0
  %v112 = vmax.f32 %v96, 0.0
  %v113 = vmax.f32 %v97, 0.0
  %v114 = vmax.f32 %v98, 0.0
  %v115 = vmax.f32 %v99, 0.0
  %v116 = vmax.f32 %v100, 0.0
  %v117 = vmax.f32 %v101, 0.0
  %v118 = vmax.f32 %v102, 0.0
  %v119 = vmax.f32 %v103, 0.0
  %v120 = vmax.f32 %v104, 0.0
  %v121 = vmax.f32 %v105, 0.0
  %122 = vst [vmem:[%s3] sm:$0xff] %v106
  %123 = vst [vmem:[%s3 + $0x8] sm:$0xff] %v107
  %124 = vst [vmem:[%s3 + $0x10] sm:$0xff] %v108
  %125 = vst [vmem:[%s3 + $0x18] sm:$0xff] %v109
  %126 = vst [vmem:[%s3 + $0x20] sm:$0xff] %v110
  %127 = vst [vmem:[%s3 + $0x28] sm:$0xff] %v111
  %128 = vst [vmem:[%s3 + $0x30] sm:$0xff] %v112
  %129 = vst [vmem:[%s3 + $0x38] sm:$0xff] %v113
  %130 = vst [vmem:[%s3 + $0x40] sm:$0xff] %v114
  %131 = vst [vmem:[%s3 + $0x48] sm:$0xff] %v115
  %132 = vst [vmem:[%s3 + $0x50] sm:$0xff] %v116
  %133 = vst [vmem:[%s3 + $0x58] sm:$0xff] %v117
  %134 = vst [vmem:[%s3 + $0x60] sm:$0xff] %v118
  %135 = vst [vmem:[%s3 + $0x68] sm:$0xff] %v119
  %136 = vst [vmem:[%s3 + $0x70] sm:$0xff] %v120
  %137 = vst [vmem:[%s3 + $0x78] sm:$0xff] %v121
  // Predicated region
  $region14: #{up_conv_forward.3} parent=0 // pred_check
    _
  $region15: #{up_conv_forward.3} parent=0 // pred_check_branch
    %139 = sbr.rel (0) target = $region17
  $region16: #{up_conv_forward.3} parent=0 // pred_region
    _
  $region17: #{up_conv_forward.3} parent=0 // pred_fallthru
    _
  // Predicated region
  $region18: #{up_conv_forward.3} parent=0 // pred_check
    _
  $region19: #{up_conv_forward.3} parent=0 // pred_check_branch
    %141 = sbr.rel (0) target = $region21
  $region20: #{up_conv_forward.3} parent=0 // pred_region
    _
  $region21: #{up_conv_forward.3} parent=0 // pred_fallthru
    _

// kernel: up_conv_forward.2
$region0: #{up_conv_forward.2}
  #allocation0 [shape = 'u32[]', space=smem, size = 0x4, offset = 0x4, fixed_abs, tag = 'smem constant byte address 0x4 - core index']
  #allocation1 [shape = 'u32[144,128]{1,0:T(1,128)}', space=vmem, size = 0x12000, scoped, tag = 'internal scratch']
  %s0 = inlined_call_operand.vmem [shape: bf16[2,18,18,4], index: 0, kind: input, shape index: {}]
  %s1 = inlined_call_operand.vmem [shape: bf16[36,32], index: 1, kind: input, shape index: {}]
  %s2 = inlined_call_operand.vmem [shape: f32[1,32], index: 2, kind: input, shape index: {}]
  %s3 = inlined_call_operand.vmem [shape: f32[2,256,32], index: 3, kind: output, shape index: {0}]
  %s4 = inlined_call_operand.vmem [shape: f32[2,2,32], index: 4, kind: output, shape index: {1}]
  %5 = xla_tuple %s3, %s4
  %s6 = sld [smem:[#allocation0]]
  $region53: #{up_conv_forward.2} parent=0
    _
  %s8 = ssub.s32 1, %s6
  %s9 = scalar_select 0, %s8, %s6
  loop: start=0, step=1, limit=4
  $region2: #{up_conv_forward.2} parent=0 // loop_pre_header
    _
  $region3: #{up_conv_forward.2} parent=0 // loop_header
    %s11 = sphi 0, %s15
    %p12 = scmp.ge.s32.totalorder %s11, 4
    %s21 = sphi 0, %s23
    %s24 = sphi 0, %s21
    %s25 = sphi 0, %s24
    %s41 = sphi 0, %s25
    %s45 = sphi 0, %s45
    %s47 = sphi 0, %s45
    %s48 = sphi 0, %s47
    %s62 = sphi 0, %s48
    %s66 = sphi 0, %s66
    %s68 = sphi 0, %s66
    %s69 = sphi 0, %s68
    %s83 = sphi 0, %s69
    %s89 = sphi 0, %s91
    %s92 = sphi 0, %s89
    %s93 = sphi 0, %s92
    %s109 = sphi 0, %s93
    %s115 = sphi 0, %s117
    %s118 = sphi 0, %s115
    %s119 = sphi 0, %s118
    %s135 = sphi 0, %s119
  $region4: #{up_conv_forward.2} parent=0 // loop_header_branch
    %14 = sbr.rel (%p12) target = $region8
  $region5: #{up_conv_forward.2} parent=0 // loop_body
    %s16 = ssub.s32 %s11, 1
    %s17 = ssub.s32 %s11, 2
    %s18 = sadd.s32 %s11, 1
    %s19 = ssub.s32 %s11, %s18
    %p20 = scmp.eq.s32.totalorder %s19, 0
    %s22 = sadd.s32 %s21, 1
    %s23 = scalar_select %p20, %s21, %s22
    %p26 = pneg %p20
    %p27 = scmp.eq.s32.totalorder %s11, 1
    %p28 = por %p26, %p27
    %p29 = scmp.ne.s32.totalorder %s21, %s24
    %p30 = scmp.eq.s32.totalorder %s11, 0
    %p31 = por %p29, %p30
    %p32 = scmp.ne.s32.totalorder %s21, %s24
    %p33 = scmp.eq.s32.totalorder %s16, 1
    %p34 = por %p32, %p33
    %p35 = scmp.ne.s32.totalorder %s24, %s25
    %p36 = scmp.eq.s32.totalorder %s16, 0
    %p37 = por %p35, %p36
    %p38 = scmp.ne.s32.totalorder %s24, %s25
    %p39 = scmp.eq.s32.totalorder %s17, 1
    %p40 = por %p38, %p39
    %p42 = scmp.ne.s32.totalorder %s25, %s41
    %p43 = scmp.eq.s32.totalorder %s17, 0
    %p44 = por %p42, %p43
    %s46 = sadd.s32 %s45, 1
    %p49 = scmp.eq.s32.totalorder %s11, 1
    %p50 = scmp.ne.s32.totalorder %s45, %s47
    %p51 = scmp.eq.s32.totalorder %s11, 0
    %p52 = por %p50, %p51
    %p53 = scmp.ne.s32.totalorder %s45, %s47
    %p54 = scmp.eq.s32.totalorder %s16, 1
    %p55 = por %p53, %p54
    %p56 = scmp.ne.s32.totalorder %s47, %s48
    %p57 = scmp.eq.s32.totalorder %s16, 0
    %p58 = por %p56, %p57
    %p59 = scmp.ne.s32.totalorder %s47, %s48
    %p60 = scmp.eq.s32.totalorder %s17, 1
    %p61 = por %p59, %p60
    %p63 = scmp.ne.s32.totalorder %s48, %s62
    %p64 = scmp.eq.s32.totalorder %s17, 0
    %p65 = por %p63, %p64
    %s67 = sadd.s32 %s66, 1
    %p70 = scmp.eq.s32.totalorder %s11, 1
    %p71 = scmp.ne.s32.totalorder %s66, %s68
    %p72 = scmp.eq.s32.totalorder %s11, 0
    %p73 = por %p71, %p72
    %p74 = scmp.ne.s32.totalorder %s66, %s68
    %p75 = scmp.eq.s32.totalorder %s16, 1
    %p76 = por %p74, %p75
    %p77 = scmp.ne.s32.totalorder %s68, %s69
    %p78 = scmp.eq.s32.totalorder %s16, 0
    %p79 = por %p77, %p78
    %p80 = scmp.ne.s32.totalorder %s68, %s69
    %p81 = scmp.eq.s32.totalorder %s17, 1
    %p82 = por %p80, %p81
    %p84 = scmp.ne.s32.totalorder %s69, %s83
    %p85 = scmp.eq.s32.totalorder %s17, 0
    %p86 = por %p84, %p85
    %s87 = ssub.s32 %s11, %s18
    %p88 = scmp.eq.s32.totalorder %s87, 0
    %s90 = sadd.s32 %s89, 1
    %s91 = scalar_select %p88, %s89, %s90
    %p94 = pneg %p88
    %p95 = scmp.eq.s32.totalorder %s11, 1
    %p96 = por %p94, %p95
    %p97 = scmp.ne.s32.totalorder %s89, %s92
    %p98 = scmp.eq.s32.totalorder %s11, 0
    %p99 = por %p97, %p98
    %p100 = scmp.ne.s32.totalorder %s89, %s92
    %p101 = scmp.eq.s32.totalorder %s16, 1
    %p102 = por %p100, %p101
    %p103 = scmp.ne.s32.totalorder %s92, %s93
    %p104 = scmp.eq.s32.totalorder %s16, 0
    %p105 = por %p103, %p104
    %p106 = scmp.ne.s32.totalorder %s92, %s93
    %p107 = scmp.eq.s32.totalorder %s17, 1
    %p108 = por %p106, %p107
    %p110 = scmp.ne.s32.totalorder %s93, %s109
    %p111 = scmp.eq.s32.totalorder %s17, 0
    %p112 = por %p110, %p111
    %s113 = ssub.s32 %s11, %s18
    %p114 = scmp.eq.s32.totalorder %s113, 0
    %s116 = sadd.s32 %s115, 1
    %s117 = scalar_select %p114, %s115, %s116
    %p120 = pneg %p114
    %p121 = scmp.eq.s32.totalorder %s11, 1
    %p122 = por %p120, %p121
    %p123 = scmp.ne.s32.totalorder %s115, %s118
    %p124 = scmp.eq.s32.totalorder %s11, 0
    %p125 = por %p123, %p124
    %p126 = scmp.ne.s32.totalorder %s115, %s118
    %p127 = scmp.eq.s32.totalorder %s16, 1
    %p128 = por %p126, %p127
    %p129 = scmp.ne.s32.totalorder %s118, %s119
    %p130 = scmp.eq.s32.totalorder %s16, 0
    %p131 = por %p129, %p130
    %p132 = scmp.ne.s32.totalorder %s118, %s119
    %p133 = scmp.eq.s32.totalorder %s17, 1
    %p134 = por %p132, %p133
    %p136 = scmp.ne.s32.totalorder %s119, %s135
    %p137 = scmp.eq.s32.totalorder %s17, 0
    %p138 = por %p136, %p137
    %p139 = scmp.le.s32.totalorder 1, %s11
    %p140 = scmp.lt.s32.totalorder %s11, 3
    %p141 = pnand %p139, %p140
    %p142 = pneg %p141
    // Predicated region
    $region9: #{up_conv_forward.2} parent=5 // pred_check
      _
    $region10: #{up_conv_forward.2} parent=5 // pred_check_branch
      %144 = sbr.rel (%p141) target = $region12
    $region11: #{up_conv_forward.2} parent=5 // pred_region
      %s145 = ssub.s32 %s11, 1
      // Predicated region
      $region13: #{up_conv_forward.2} parent=11 // pred_check
        %p146 = pneg %p58
      $region14: #{up_conv_forward.2} parent=11 // pred_check_branch
        %148 = sbr.rel (%p146) target = $region16
      $region15: #{up_conv_forward.2} parent=11 // pred_region
        _
      $region16: #{up_conv_forward.2} parent=11 // pred_fallthru
        _
      // Predicated region
      $region17: #{up_conv_forward.2} parent=11 // pred_check
        %p149 = pneg %p79
      $region18: #{up_conv_forward.2} parent=11 // pred_check_branch
        %151 = sbr.rel (%p149) target = $region20
      $region19: #{up_conv_forward.2} parent=11 // pred_region
        _
      $region20: #{up_conv_forward.2} parent=11 // pred_fallthru
        _
    $region12: #{up_conv_forward.2} parent=5 // pred_fallthru
      _
    %p152 = scmp.lt.s32.totalorder %s11, 2
    // Predicated region
    $region21: #{up_conv_forward.2} parent=5 // pred_check
      %p153 = pneg %p152
    $region22: #{up_conv_forward.2} parent=5 // pred_check_branch
      %155 = sbr.rel (%p153) target = $region24
    $region23: #{up_conv_forward.2} parent=5 // pred_region
      // Predicated region
      $region25: #{up_conv_forward.2} parent=23 // pred_check
        %p156 = pneg %p31
      $region26: #{up_conv_forward.2} parent=23 // pred_check_branch
        %158 = sbr.rel (%p156) target = $region28
      $region27: #{up_conv_forward.2} parent=23 // pred_region
        %p159 = scmp.lt.s32.totalorder %s11, 1
        %s160 = scalar_select %p159, %s11, 1
        %s161 = smul.addr %s160, 54
        %s162 = smul.addr %s161, 4
        %s163 = scalar_lea.vmem %s0, %s162
      $region28: #{up_conv_forward.2} parent=23 // pred_fallthru
        _
    $region24: #{up_conv_forward.2} parent=5 // pred_fallthru
      _
    %p164 = scmp.le.s32.totalorder 1, %s11
    %p165 = scmp.lt.s32.totalorder %s11, 3
    %p166 = pnand %p164, %p165
    %p167 = pneg %p166
    // Predicated region
    $region29: #{up_conv_forward.2} parent=5 // pred_check
      _
    $region30: #{up_conv_forward.2} parent=5 // pred_check_branch
      %169 = sbr.rel (%p166) target = $region32
    $region31: #{up_conv_forward.2} parent=5 // pred_region
      %s170 = ssub.s32 %s11, 1
      %p171 = scmp.lt.s32.totalorder %s16, 1
      %s172 = scalar_select %p171, %s16, 1
      %s173 = smul.addr %s172, 54
      %s174 = smul.addr %s173, 4
      %s175 = scalar_lea.vmem %s0, %s174
      %p176 = pneg %p37
      %p177 = pneg %p34
      %p178 = pneg %p58
      %p179 = pneg %p55
      %p180 = pneg %p79
      %p181 = pneg %p76
      %p182 = pneg %p105
      %p183 = pneg %p102
      %p184 = scmp.lt.s32.totalorder %s16, 1
      %s185 = scalar_select %p184, %s16, 1
      %s186 = smul.addr %s185, 32
      %s187 = smul.addr %s186, 8
      %s188 = scalar_lea.vmem %s3, %s187
      %p189 = pneg %p131
      %p190 = pneg %p128
      %p191 = scmp.lt.s32.totalorder %s16, 1
      %s192 = scalar_select %p191, %s16, 1
      %s193 = smul.addr %s192, 2
      %s194 = scalar_lea.vmem %s4, %s193
      %p195 = scmp.lt.s32.totalorder %s16, 1
      %s196 = scalar_select %p195, %s16, 1
      %s197 = smul.addr %s196, 54
      %s198 = smul.addr %s197, 4
      %s199 = scalar_lea.vmem %s0, %s198
      %p200 = scmp.lt.s32.totalorder %s16, 1
      %s201 = scalar_select %p200, %s16, 1
      %s202 = smul.addr %s201, 32
      %s203 = smul.addr %s202, 8
      %s204 = scalar_lea.vmem %s3, %s203
      %p205 = scmp.lt.s32.totalorder %s16, 1
      %s206 = scalar_select %p205, %s16, 1
      %s207 = smul.addr %s206, 2
      %s208 = scalar_lea.vmem %s4, %s207
      %v210 = vld [vmem:[%s199] sm:$0xf]
      %v211 = vld [vmem:[%s199 + $0x4] sm:$0xf]
      %v212 = vld [vmem:[%s199 + $0x8] sm:$0x1]
      %v213 = vld [vmem:[%s199 + $0xc] sm:$0xf]
      %v214 = vld [vmem:[%s199 + $0x10] sm:$0xf]
      %v215 = vld [vmem:[%s199 + $0x14] sm:$0x1]
      %v216 = vld [vmem:[%s199 + $0x18] sm:$0xf]
      %v217 = vld [vmem:[%s199 + $0x1c] sm:$0xf]
      %v218 = vld [vmem:[%s199 + $0x20] sm:$0x1]
      %v219 = vld [vmem:[%s199 + $0x24] sm:$0xf]
      %v220 = vld [vmem:[%s199 + $0x28] sm:$0xf]
      %v221 = vld [vmem:[%s199 + $0x2c] sm:$0x1]
      %v222 = vld [vmem:[%s199 + $0x30] sm:$0xf]
      %v223 = vld [vmem:[%s199 + $0x34] sm:$0xf]
      %v224 = vld [vmem:[%s199 + $0x38] sm:$0x1]
      %v225 = vld [vmem:[%s199 + $0x3c] sm:$0xf]
      %v226 = vld [vmem:[%s199 + $0x40] sm:$0xf]
      %v227 = vld [vmem:[%s199 + $0x44] sm:$0x1]
      %v228 = vld [vmem:[%s199 + $0x48] sm:$0xf]
      %v229 = vld [vmem:[%s199 + $0x4c] sm:$0xf]
      %v230 = vld [vmem:[%s199 + $0x50] sm:$0x1]
      %v231 = vld [vmem:[%s199 + $0x54] sm:$0xf]
      %v232 = vld [vmem:[%s199 + $0x58] sm:$0xf]
      %v233 = vld [vmem:[%s199 + $0x5c] sm:$0x1]
      %v234 = vld [vmem:[%s199 + $0x60] sm:$0xf]
      %v235 = vld [vmem:[%s199 + $0x64] sm:$0xf]
      %v236 = vld [vmem:[%s199 + $0x68] sm:$0x1]
      %v237 = vld [vmem:[%s199 + $0x6c] sm:$0xf]
      %v238 = vld [vmem:[%s199 + $0x70] sm:$0xf]
      %v239 = vld [vmem:[%s199 + $0x74] sm:$0x1]
      %v240 = vld [vmem:[%s199 + $0x78] sm:$0xf]
      %v241 = vld [vmem:[%s199 + $0x7c] sm:$0xf]
      %v242 = vld [vmem:[%s199 + $0x80] sm:$0x1]
      %v243 = vld [vmem:[%s199 + $0x84] sm:$0xf]
      %v244 = vld [vmem:[%s199 + $0x88] sm:$0xf]
      %v245 = vld [vmem:[%s199 + $0x8c] sm:$0x1]
      %v246 = vld [vmem:[%s199 + $0x90] sm:$0xf]
      %v247 = vld [vmem:[%s199 + $0x94] sm:$0xf]
      %v248 = vld [vmem:[%s199 + $0x98] sm:$0x1]
      %v249 = vld [vmem:[%s199 + $0x9c] sm:$0xf]
      %v250 = vld [vmem:[%s199 + $0xa0] sm:$0xf]
      %v251 = vld [vmem:[%s199 + $0xa4] sm:$0x1]
      %v252 = vld [vmem:[%s199 + $0xa8] sm:$0xf]
      %v253 = vld [vmem:[%s199 + $0xac] sm:$0xf]
      %v254 = vld [vmem:[%s199 + $0xb0] sm:$0x1]
      %v255 = vld [vmem:[%s199 + $0xb4] sm:$0xf]
      %v256 = vld [vmem:[%s199 + $0xb8] sm:$0xf]
      %v257 = vld [vmem:[%s199 + $0xbc] sm:$0x1]
      %v258 = vld [vmem:[%s199 + $0xc0] sm:$0xf]
      %v259 = vld [vmem:[%s199 + $0xc4] sm:$0xf]
      %v260 = vld [vmem:[%s199 + $0xc8] sm:$0x1]
      %v261 = vld [vmem:[%s199 + $0xcc] sm:$0xf]
      %v262 = vld [vmem:[%s199 + $0xd0] sm:$0xf]
      %v263 = vld [vmem:[%s199 + $0xd4] sm:$0x1]
      %vm264 = vsmask.f32 3328
      %vm265 = vsmask.f32 7440
      %vm266 = vmor %vm264, %vm265
      %v268 = vshrl.u32 %v210, 16
      %v270 = vrot.slane %v268, 4
      %v271 = vshll.u32 %v210, 16
      %v273 = vrot.slane %v271, 5
      %v274 = vor.u32 %v270, %v273
      %v275 = vrot.slane %v274, 4
      %v277 = vshll.u32 %v211, 16
      %v279 = vrot.slane %v277, 5
      %v280 = vsel %vm266, %v275, %v279
      %v281 = vshrl.u32 %v211, 16
      %v283 = vrot.slane %v281, 4
      %v284 = vor.u32 %v283, %v279
      %v285 = vrot.slane %v284, 4
      %v287 = vshll.u32 %v212, 16
      %v289 = vrot.slane %v287, 5
      %v290 = vsel %vm266, %v285, %v289
      %v292 = vshrl.u32 %v213, 16
      %v294 = vrot.slane %v292, 4
      %v295 = vshll.u32 %v213, 16
      %v297 = vrot.slane %v295, 5
      %v298 = vor.u32 %v294, %v297
      %v299 = vrot.slane %v298, 4
      %v301 = vshll.u32 %v214, 16
      %v303 = vrot.slane %v301, 5
      %v304 = vsel %vm266, %v299, %v303
      %v305 = vshrl.u32 %v214, 16
      %v307 = vrot.slane %v305, 4
      %v308 = vor.u32 %v307, %v303
      %v309 = vrot.slane %v308, 4
      %v311 = vshll.u32 %v215, 16
      %v313 = vrot.slane %v311, 5
      %v314 = vsel %vm266, %v309, %v313
      %v316 = vshrl.u32 %v216, 16
      %v318 = vrot.slane %v316, 4
      %v319 = vshll.u32 %v216, 16
      %v321 = vrot.slane %v319, 5
      %v322 = vor.u32 %v318, %v321
      %v323 = vrot.slane %v322, 4
      %v325 = vshll.u32 %v217, 16
      %v327 = vrot.slane %v325, 5
      %v328 = vsel %vm266, %v323, %v327
      %v329 = vshrl.u32 %v217, 16
      %v331 = vrot.slane %v329, 4
      %v332 = vor.u32 %v331, %v327
      %v333 = vrot.slane %v332, 4
      %v335 = vshll.u32 %v218, 16
      %v337 = vrot.slane %v335, 5
      %v338 = vsel %vm266, %v333, %v337
      %v340 = vshrl.u32 %v219, 16
      %v342 = vrot.slane %v340, 4
      %v343 = vshll.u32 %v219, 16
      %v345 = vrot.slane %v343, 5
      %v346 = vor.u32 %v342, %v345
      %v347 = vrot.slane %v346, 4
      %v349 = vshll.u32 %v220, 16
      %v351 = vrot.slane %v349, 5
      %v352 = vsel %vm266, %v347, %v351
      %v353 = vshrl.u32 %v220, 16
      %v355 = vrot.slane %v353, 4
      %v356 = vor.u32 %v355, %v351
      %v357 = vrot.slane %v356, 4
      %v359 = vshll.u32 %v221, 16
      %v361 = vrot.slane %v359, 5
      %v362 = vsel %vm266, %v357, %v361
      %v364 = vshrl.u32 %v222, 16
      %v366 = vrot.slane %v364, 4
      %v367 = vshll.u32 %v222, 16
      %v369 = vrot.slane %v367, 5
      %v370 = vor.u32 %v366, %v369
      %v371 = vrot.slane %v370, 4
      %v373 = vshll.u32 %v223, 16
      %v375 = vrot.slane %v373, 5
      %v376 = vsel %vm266, %v371, %v375
      %v377 = vshrl.u32 %v223, 16
      %v379 = vrot.slane %v377, 4
      %v380 = vor.u32 %v379, %v375
      %v381 = vrot.slane %v380, 4
      %v383 = vshll.u32 %v224, 16
      %v385 = vrot.slane %v383, 5
      %v386 = vsel %vm266, %v381, %v385
      %v388 = vshrl.u32 %v225, 16
      %v390 = vrot.slane %v388, 4
      %v391 = vshll.u32 %v225, 16
      %v393 = vrot.slane %v391, 5
      %v394 = vor.u32 %v390, %v393
      %v395 = vrot.slane %v394, 4
      %v397 = vshll.u32 %v226, 16
      %v399 = vrot.slane %v397, 5
      %v400 = vsel %vm266, %v395, %v399
      %v401 = vshrl.u32 %v226, 16
      %v403 = vrot.slane %v401, 4
      %v404 = vor.u32 %v403, %v399
      %v405 = vrot.slane %v404, 4
      %v407 = vshll.u32 %v227, 16
      %v409 = vrot.slane %v407, 5
      %v410 = vsel %vm266, %v405, %v409
      %v412 = vshrl.u32 %v228, 16
      %v414 = vrot.slane %v412, 4
      %v415 = vshll.u32 %v228, 16
      %v417 = vrot.slane %v415, 5
      %v418 = vor.u32 %v414, %v417
      %v419 = vrot.slane %v418, 4
      %v421 = vshll.u32 %v229, 16
      %v423 = vrot.slane %v421, 5
      %v424 = vsel %vm266, %v419, %v423
      %v425 = vshrl.u32 %v229, 16
      %v427 = vrot.slane %v425, 4
      %v428 = vor.u32 %v427, %v423
      %v429 = vrot.slane %v428, 4
      %v431 = vshll.u32 %v230, 16
      %v433 = vrot.slane %v431, 5
      %v434 = vsel %vm266, %v429, %v433
      %v436 = vshrl.u32 %v231, 16
      %v438 = vrot.slane %v436, 4
      %v439 = vshll.u32 %v231, 16
      %v441 = vrot.slane %v439, 5
      %v442 = vor.u32 %v438, %v441
      %v443 = vrot.slane %v442, 4
      %v445 = vshll.u32 %v232, 16
      %v447 = vrot.slane %v445, 5
      %v448 = vsel %vm266, %v443, %v447
      %v449 = vshrl.u32 %v232, 16
      %v451 = vrot.slane %v449, 4
      %v452 = vor.u32 %v451, %v447
      %v453 = vrot.slane %v452, 4
      %v455 = vshll.u32 %v233, 16
      %v457 = vrot.slane %v455, 5
      %v458 = vsel %vm266, %v453, %v457
      %v460 = vshrl.u32 %v234, 16
      %v462 = vrot.slane %v460, 4
      %v463 = vshll.u32 %v234, 16
      %v465 = vrot.slane %v463, 5
      %v466 = vor.u32 %v462, %v465
      %v467 = vrot.slane %v466, 4
      %v469 = vshll.u32 %v235, 16
      %v471 = vrot.slane %v469, 5
      %v472 = vsel %vm266, %v467, %v471
      %v473 = vshrl.u32 %v235, 16
      %v475 = vrot.slane %v473, 4
      %v476 = vor.u32 %v475, %v471
      %v477 = vrot.slane %v476, 4
      %v479 = vshll.u32 %v236, 16
      %v481 = vrot.slane %v479, 5
      %v482 = vsel %vm266, %v477, %v481
      %v484 = vshrl.u32 %v237, 16
      %v486 = vrot.slane %v484, 4
      %v487 = vshll.u32 %v237, 16
      %v489 = vrot.slane %v487, 5
      %v490 = vor.u32 %v486, %v489
      %v491 = vrot.slane %v490, 4
      %v493 = vshll.u32 %v238, 16
      %v495 = vrot.slane %v493, 5
      %v496 = vsel %vm266, %v491, %v495
      %v497 = vshrl.u32 %v238, 16
      %v499 = vrot.slane %v497, 4
      %v500 = vor.u32 %v499, %v495
      %v501 = vrot.slane %v500, 4
      %v503 = vshll.u32 %v239, 16
      %v505 = vrot.slane %v503, 5
      %v506 = vsel %vm266, %v501, %v505
      %v508 = vshrl.u32 %v240, 16
      %v510 = vrot.slane %v508, 4
      %v511 = vshll.u32 %v240, 16
      %v513 = vrot.slane %v511, 5
      %v514 = vor.u32 %v510, %v513
      %v515 = vrot.slane %v514, 4
      %v517 = vshll.u32 %v241, 16
      %v519 = vrot.slane %v517, 5
      %v520 = vsel %vm266, %v515, %v519
      %v521 = vshrl.u32 %v241, 16
      %v523 = vrot.slane %v521, 4
      %v524 = vor.u32 %v523, %v519
      %v525 = vrot.slane %v524, 4
      %v527 = vshll.u32 %v242, 16
      %v529 = vrot.slane %v527, 5
      %v530 = vsel %vm266, %v525, %v529
      %v532 = vshrl.u32 %v243, 16
      %v534 = vrot.slane %v532, 4
      %v535 = vshll.u32 %v243, 16
      %v537 = vrot.slane %v535, 5
      %v538 = vor.u32 %v534, %v537
      %v539 = vrot.slane %v538, 4
      %v541 = vshll.u32 %v244, 16
      %v543 = vrot.slane %v541, 5
      %v544 = vsel %vm266, %v539, %v543
      %v545 = vshrl.u32 %v244, 16
      %v547 = vrot.slane %v545, 4
      %v548 = vor.u32 %v547, %v543
      %v549 = vrot.slane %v548, 4
      %v551 = vshll.u32 %v245, 16
      %v553 = vrot.slane %v551, 5
      %v554 = vsel %vm266, %v549, %v553
      %v556 = vshrl.u32 %v246, 16
      %v558 = vrot.slane %v556, 4
      %v559 = vshll.u32 %v246, 16
      %v561 = vrot.slane %v559, 5
      %v562 = vor.u32 %v558, %v561
      %v563 = vrot.slane %v562, 4
      %v565 = vshll.u32 %v247, 16
      %v567 = vrot.slane %v565, 5
      %v568 = vsel %vm266, %v563, %v567
      %v569 = vshrl.u32 %v247, 16
      %v571 = vrot.slane %v569, 4
      %v572 = vor.u32 %v571, %v567
      %v573 = vrot.slane %v572, 4
      %v575 = vshll.u32 %v248, 16
      %v577 = vrot.slane %v575, 5
      %v578 = vsel %vm266, %v573, %v577
      %v580 = vshrl.u32 %v249, 16
      %v582 = vrot.slane %v580, 4
      %v583 = vshll.u32 %v249, 16
      %v585 = vrot.slane %v583, 5
      %v586 = vor.u32 %v582, %v585
      %v587 = vrot.slane %v586, 4
      %v589 = vshll.u32 %v250, 16
      %v591 = vrot.slane %v589, 5
      %v592 = vsel %vm266, %v587, %v591
      %v593 = vshrl.u32 %v250, 16
      %v595 = vrot.slane %v593, 4
      %v596 = vor.u32 %v595, %v591
      %v597 = vrot.slane %v596, 4
      %v599 = vshll.u32 %v251, 16
      %v601 = vrot.slane %v599, 5
      %v602 = vsel %vm266, %v597, %v601
      %v604 = vshrl.u32 %v252, 16
      %v606 = vrot.slane %v604, 4
      %v607 = vshll.u32 %v252, 16
      %v609 = vrot.slane %v607, 5
      %v610 = vor.u32 %v606, %v609
      %v611 = vrot.slane %v610, 4
      %v613 = vshll.u32 %v253, 16
      %v615 = vrot.slane %v613, 5
      %v616 = vsel %vm266, %v611, %v615
      %v617 = vshrl.u32 %v253, 16
      %v619 = vrot.slane %v617, 4
      %v620 = vor.u32 %v619, %v615
      %v621 = vrot.slane %v620, 4
      %v623 = vshll.u32 %v254, 16
      %v625 = vrot.slane %v623, 5
      %v626 = vsel %vm266, %v621, %v625
      %v628 = vshrl.u32 %v255, 16
      %v630 = vrot.slane %v628, 4
      %v631 = vshll.u32 %v255, 16
      %v633 = vrot.slane %v631, 5
      %v634 = vor.u32 %v630, %v633
      %v635 = vrot.slane %v634, 4
      %v637 = vshll.u32 %v256, 16
      %v639 = vrot.slane %v637, 5
      %v640 = vsel %vm266, %v635, %v639
      %v641 = vshrl.u32 %v256, 16
      %v643 = vrot.slane %v641, 4
      %v644 = vor.u32 %v643, %v639
      %v645 = vrot.slane %v644, 4
      %v647 = vshll.u32 %v257, 16
      %v649 = vrot.slane %v647, 5
      %v650 = vsel %vm266, %v645, %v649
      %vm699 = vcmask 1042432
      %vm700 = vcmask 1046532
      %vm701 = vmor %vm699, %vm700
      %v702 = vrot.slane %v210, 5
      %v703 = vrot.slane %v702, 4
      %v704 = vrot.slane %v211, 5
      %v705 = vsel %vm701, %v703, %v704
      %v706 = vrot.slane %v704, 4
      %v707 = vrot.slane %v212, 5
      %v708 = vsel %vm701, %v706, %v707
      %v709 = vrot.slane %v213, 5
      %v710 = vrot.slane %v709, 4
      %v711 = vrot.slane %v214, 5
      %v712 = vsel %vm701, %v710, %v711
      %v713 = vrot.slane %v711, 4
      %v714 = vrot.slane %v215, 5
      %v715 = vsel %vm701, %v713, %v714
      %v716 = vrot.slane %v216, 5
      %v717 = vrot.slane %v716, 4
      %v718 = vrot.slane %v217, 5
      %v719 = vsel %vm701, %v717, %v718
      %v720 = vrot.slane %v718, 4
      %v721 = vrot.slane %v218, 5
      %v722 = vsel %vm701, %v720, %v721
      %v723 = vrot.slane %v219, 5
      %v724 = vrot.slane %v723, 4
      %v725 = vrot.slane %v220, 5
      %v726 = vsel %vm701, %v724, %v725
      %v727 = vrot.slane %v725, 4
      %v728 = vrot.slane %v221, 5
      %v729 = vsel %vm701, %v727, %v728
      %v730 = vrot.slane %v222, 5
      %v731 = vrot.slane %v730, 4
      %v732 = vrot.slane %v223, 5
      %v733 = vsel %vm701, %v731, %v732
      %v734 = vrot.slane %v732, 4
      %v735 = vrot.slane %v224, 5
      %v736 = vsel %vm701, %v734, %v735
      %v737 = vrot.slane %v225, 5
      %v738 = vrot.slane %v737, 4
      %v739 = vrot.slane %v226, 5
      %v740 = vsel %vm701, %v738, %v739
      %v741 = vrot.slane %v739, 4
      %v742 = vrot.slane %v227, 5
      %v743 = vsel %vm701, %v741, %v742
      %v744 = vrot.slane %v228, 5
      %v745 = vrot.slane %v744, 4
      %v746 = vrot.slane %v229, 5
      %v747 = vsel %vm701, %v745, %v746
      %v748 = vrot.slane %v746, 4
      %v749 = vrot.slane %v230, 5
      %v750 = vsel %vm701, %v748, %v749
      %v751 = vrot.slane %v231, 5
      %v752 = vrot.slane %v751, 4
      %v753 = vrot.slane %v232, 5
      %v754 = vsel %vm701, %v752, %v753
      %v755 = vrot.slane %v753, 4
      %v756 = vrot.slane %v233, 5
      %v757 = vsel %vm701, %v755, %v756
      %v758 = vrot.slane %v234, 5
      %v759 = vrot.slane %v758, 4
      %v760 = vrot.slane %v235, 5
      %v761 = vsel %vm701, %v759, %v760
      %v762 = vrot.slane %v760, 4
      %v763 = vrot.slane %v236, 5
      %v764 = vsel %vm701, %v762, %v763
      %v765 = vrot.slane %v237, 5
      %v766 = vrot.slane %v765, 4
      %v767 = vrot.slane %v238, 5
      %v768 = vsel %vm701, %v766, %v767
      %v769 = vrot.slane %v767, 4
      %v770 = vrot.slane %v239, 5
      %v771 = vsel %vm701, %v769, %v770
      %v772 = vrot.slane %v240, 5
      %v773 = vrot.slane %v772, 4
      %v774 = vrot.slane %v241, 5
      %v775 = vsel %vm701, %v773, %v774
      %v776 = vrot.slane %v774, 4
      %v777 = vrot.slane %v242, 5
      %v778 = vsel %vm701, %v776, %v777
      %v779 = vrot.slane %v243, 5
      %v780 = vrot.slane %v779, 4
      %v781 = vrot.slane %v244, 5
      %v782 = vsel %vm701, %v780, %v781
      %v783 = vrot.slane %v781, 4
      %v784 = vrot.slane %v245, 5
      %v785 = vsel %vm701, %v783, %v784
      %v786 = vrot.slane %v246, 5
      %v787 = vrot.slane %v786, 4
      %v788 = vrot.slane %v247, 5
      %v789 = vsel %vm701, %v787, %v788
      %v790 = vrot.slane %v788, 4
      %v791 = vrot.slane %v248, 5
      %v792 = vsel %vm701, %v790, %v791
      %v793 = vrot.slane %v249, 5
      %v794 = vrot.slane %v793, 4
      %v795 = vrot.slane %v250, 5
      %v796 = vsel %vm701, %v794, %v795
      %v797 = vrot.slane %v795, 4
      %v798 = vrot.slane %v251, 5
      %v799 = vsel %vm701, %v797, %v798
      %v800 = vrot.slane %v252, 5
      %v801 = vrot.slane %v800, 4
      %v802 = vrot.slane %v253, 5
      %v803 = vsel %vm701, %v801, %v802
      %v804 = vrot.slane %v802, 4
      %v805 = vrot.slane %v254, 5
      %v806 = vsel %vm701, %v804, %v805
      %v807 = vrot.slane %v255, 5
      %v808 = vrot.slane %v807, 4
      %v809 = vrot.slane %v256, 5
      %v810 = vsel %vm701, %v808, %v809
      %v811 = vrot.slane %v809, 4
      %v812 = vrot.slane %v257, 5
      %v813 = vsel %vm701, %v811, %v812
      %v815 = vshrl.u32 %v258, 16
      %v817 = vrot.slane %v815, 4
      %v818 = vshll.u32 %v258, 16
      %v820 = vrot.slane %v818, 5
      %v821 = vor.u32 %v817, %v820
      %v822 = vrot.slane %v821, 4
      %v824 = vshll.u32 %v259, 16
      %v826 = vrot.slane %v824, 5
      %v827 = vsel %vm266, %v822, %v826
      %v828 = vshrl.u32 %v259, 16
      %v830 = vrot.slane %v828, 4
      %v831 = vor.u32 %v830, %v826
      %v832 = vrot.slane %v831, 4
      %v834 = vshll.u32 %v260, 16
      %v836 = vrot.slane %v834, 5
      %v837 = vsel %vm266, %v832, %v836
      %v841 = vrot.slane %v258, 5
      %v842 = vrot.slane %v841, 4
      %v843 = vrot.slane %v259, 5
      %v844 = vsel %vm701, %v842, %v843
      %v845 = vrot.slane %v843, 4
      %v846 = vrot.slane %v260, 5
      %v847 = vsel %vm701, %v845, %v846
      %v849 = vshrl.u32 %v261, 16
      %v851 = vrot.slane %v849, 4
      %v852 = vshll.u32 %v261, 16
      %v854 = vrot.slane %v852, 5
      %v855 = vor.u32 %v851, %v854
      %v856 = vrot.slane %v855, 4
      %v858 = vshll.u32 %v262, 16
      %v860 = vrot.slane %v858, 5
      %v861 = vsel %vm266, %v856, %v860
      %v862 = vshrl.u32 %v262, 16
      %v864 = vrot.slane %v862, 4
      %v865 = vor.u32 %v864, %v860
      %v866 = vrot.slane %v865, 4
      %v868 = vshll.u32 %v263, 16
      %v870 = vrot.slane %v868, 5
      %v871 = vsel %vm266, %v866, %v870
      %v875 = vrot.slane %v261, 5
      %v876 = vrot.slane %v875, 4
      %v877 = vrot.slane %v262, 5
      %v878 = vsel %vm701, %v876, %v877
      %v879 = vrot.slane %v877, 4
      %v880 = vrot.slane %v263, 5
      %v881 = vsel %vm701, %v879, %v880
      %v882 = vunpack.c.l.b16 %v210
      %v883 = vunpack.c.l.b16 %v211
      %v884 = vunpack.c.l.b16 %v213
      %v885 = vunpack.c.l.b16 %v214
      %v886 = vunpack.c.l.b16 %v216
      %v887 = vunpack.c.l.b16 %v217
      %v888 = vunpack.c.l.b16 %v219
      %v889 = vunpack.c.l.b16 %v220
      %v890 = vunpack.c.l.b16 %v222
      %v891 = vunpack.c.l.b16 %v223
      %v892 = vunpack.c.l.b16 %v225
      %v893 = vunpack.c.l.b16 %v226
      %v894 = vunpack.c.l.b16 %v228
      %v895 = vunpack.c.l.b16 %v229
      %v896 = vunpack.c.l.b16 %v231
      %v897 = vunpack.c.l.b16 %v232
      %v898 = vunpack.c.l.b16 %v234
      %v899 = vunpack.c.l.b16 %v235
      %v900 = vunpack.c.l.b16 %v237
      %v901 = vunpack.c.l.b16 %v238
      %v902 = vunpack.c.l.b16 %v240
      %v903 = vunpack.c.l.b16 %v241
      %v904 = vunpack.c.l.b16 %v243
      %v905 = vunpack.c.l.b16 %v244
      %v906 = vunpack.c.l.b16 %v246
      %v907 = vunpack.c.l.b16 %v247
      %v908 = vunpack.c.l.b16 %v249
      %v909 = vunpack.c.l.b16 %v250
      %v910 = vunpack.c.l.b16 %v252
      %v911 = vunpack.c.l.b16 %v253
      %v912 = vunpack.c.l.b16 %v255
      %v913 = vunpack.c.l.b16 %v256
      %v914 = vpack.c.b16 %v883, %v882
      %v915 = vpack.c.b16 %v885, %v884
      %v916 = vpack.c.b16 %v887, %v886
      %v917 = vpack.c.b16 %v889, %v888
      %v918 = vpack.c.b16 %v891, %v890
      %v919 = vpack.c.b16 %v893, %v892
      %v920 = vpack.c.b16 %v895, %v894
      %v921 = vpack.c.b16 %v897, %v896
      %v922 = vpack.c.b16 %v899, %v898
      %v923 = vpack.c.b16 %v901, %v900
      %v924 = vpack.c.b16 %v903, %v902
      %v925 = vpack.c.b16 %v905, %v904
      %v926 = vpack.c.b16 %v907, %v906
      %v927 = vpack.c.b16 %v909, %v908
      %v928 = vpack.c.b16 %v911, %v910
      %v929 = vpack.c.b16 %v913, %v912
      %v930 = vunpack.c.l.b16 %v280
      %v931 = vunpack.c.l.b16 %v290
      %v932 = vunpack.c.l.b16 %v304
      %v933 = vunpack.c.l.b16 %v314
      %v934 = vunpack.c.l.b16 %v328
      %v935 = vunpack.c.l.b16 %v338
      %v936 = vunpack.c.l.b16 %v352
      %v937 = vunpack.c.l.b16 %v362
      %v938 = vunpack.c.l.b16 %v376
      %v939 = vunpack.c.l.b16 %v386
      %v940 = vunpack.c.l.b16 %v400
      %v941 = vunpack.c.l.b16 %v410
      %v942 = vunpack.c.l.b16 %v424
      %v943 = vunpack.c.l.b16 %v434
      %v944 = vunpack.c.l.b16 %v448
      %v945 = vunpack.c.l.b16 %v458
      %v946 = vunpack.c.l.b16 %v472
      %v947 = vunpack.c.l.b16 %v482
      %v948 = vunpack.c.l.b16 %v496
      %v949 = vunpack.c.l.b16 %v506
      %v950 = vunpack.c.l.b16 %v520
      %v951 = vunpack.c.l.b16 %v530
      %v952 = vunpack.c.l.b16 %v544
      %v953 = vunpack.c.l.b16 %v554
      %v954 = vunpack.c.l.b16 %v568
      %v955 = vunpack.c.l.b16 %v578
      %v956 = vunpack.c.l.b16 %v592
      %v957 = vunpack.c.l.b16 %v602
      %v958 = vunpack.c.l.b16 %v616
      %v959 = vunpack.c.l.b16 %v626
      %v960 = vunpack.c.l.b16 %v640
      %v961 = vunpack.c.l.b16 %v650
      %v962 = vpack.c.b16 %v931, %v930
      %v963 = vpack.c.b16 %v933, %v932
      %v964 = vpack.c.b16 %v935, %v934
      %v965 = vpack.c.b16 %v937, %v936
      %v966 = vpack.c.b16 %v939, %v938
      %v967 = vpack.c.b16 %v941, %v940
      %v968 = vpack.c.b16 %v943, %v942
      %v969 = vpack.c.b16 %v945, %v944
      %v970 = vpack.c.b16 %v947, %v946
      %v971 = vpack.c.b16 %v949, %v948
      %v972 = vpack.c.b16 %v951, %v950
      %v973 = vpack.c.b16 %v953, %v952
      %v974 = vpack.c.b16 %v955, %v954
      %v975 = vpack.c.b16 %v957, %v956
      %v976 = vpack.c.b16 %v959, %v958
      %v977 = vpack.c.b16 %v961, %v960
      %978 = vrot.lane.b32.xlu0 %v962, 4
      %v979 = vpop.permute.xlu0 %978
      %980 = vrot.lane.b32.xlu0 %v963, 4
      %v981 = vpop.permute.xlu0 %980
      %982 = vrot.lane.b32.xlu0 %v964, 4
      %v983 = vpop.permute.xlu0 %982
      %984 = vrot.lane.b32.xlu0 %v965, 4
      %v985 = vpop.permute.xlu0 %984
      %986 = vrot.lane.b32.xlu0 %v966, 4
      %v987 = vpop.permute.xlu0 %986
      %988 = vrot.lane.b32.xlu0 %v967, 4
      %v989 = vpop.permute.xlu0 %988
      %990 = vrot.lane.b32.xlu0 %v968, 4
      %v991 = vpop.permute.xlu0 %990
      %992 = vrot.lane.b32.xlu0 %v969, 4
      %v993 = vpop.permute.xlu0 %992
      %994 = vrot.lane.b32.xlu0 %v970, 4
      %v995 = vpop.permute.xlu0 %994
      %996 = vrot.lane.b32.xlu0 %v971, 4
      %v997 = vpop.permute.xlu0 %996
      %998 = vrot.lane.b32.xlu0 %v972, 4
      %v999 = vpop.permute.xlu0 %998
      %1000 = vrot.lane.b32.xlu0 %v973, 4
      %v1001 = vpop.permute.xlu0 %1000
      %1002 = vrot.lane.b32.xlu0 %v974, 4
      %v1003 = vpop.permute.xlu0 %1002
      %1004 = vrot.lane.b32.xlu0 %v975, 4
      %v1005 = vpop.permute.xlu0 %1004
      %1006 = vrot.lane.b32.xlu0 %v976, 4
      %v1007 = vpop.permute.xlu0 %1006
      %1008 = vrot.lane.b32.xlu0 %v977, 4
      %v1009 = vpop.permute.xlu0 %1008
      %v1010 = vunpack.c.l.b16 %v705
      %v1011 = vunpack.c.l.b16 %v708
      %v1012 = vunpack.c.l.b16 %v712
      %v1013 = vunpack.c.l.b16 %v715
      %v1014 = vunpack.c.l.b16 %v719
      %v1015 = vunpack.c.l.b16 %v722
      %v1016 = vunpack.c.l.b16 %v726
      %v1017 = vunpack.c.l.b16 %v729
      %v1018 = vunpack.c.l.b16 %v733
      %v1019 = vunpack.c.l.b16 %v736
      %v1020 = vunpack.c.l.b16 %v740
      %v1021 = vunpack.c.l.b16 %v743
      %v1022 = vunpack.c.l.b16 %v747
      %v1023 = vunpack.c.l.b16 %v750
      %v1024 = vunpack.c.l.b16 %v754
      %v1025 = vunpack.c.l.b16 %v757
      %v1026 = vunpack.c.l.b16 %v761
      %v1027 = vunpack.c.l.b16 %v764
      %v1028 = vunpack.c.l.b16 %v768
      %v1029 = vunpack.c.l.b16 %v771
      %v1030 = vunpack.c.l.b16 %v775
      %v1031 = vunpack.c.l.b16 %v778
      %v1032 = vunpack.c.l.b16 %v782
      %v1033 = vunpack.c.l.b16 %v785
      %v1034 = vunpack.c.l.b16 %v789
      %v1035 = vunpack.c.l.b16 %v792
      %v1036 = vunpack.c.l.b16 %v796
      %v1037 = vunpack.c.l.b16 %v799
      %v1038 = vunpack.c.l.b16 %v803
      %v1039 = vunpack.c.l.b16 %v806
      %v1040 = vunpack.c.l.b16 %v810
      %v1041 = vunpack.c.l.b16 %v813
      %v1042 = vpack.c.b16 %v1011, %v1010
      %v1043 = vpack.c.b16 %v1013, %v1012
      %v1044 = vpack.c.b16 %v1015, %v1014
      %v1045 = vpack.c.b16 %v1017, %v1016
      %v1046 = vpack.c.b16 %v1019, %v1018
      %v1047 = vpack.c.b16 %v1021, %v1020
      %v1048 = vpack.c.b16 %v1023, %v1022
      %v1049 = vpack.c.b16 %v1025, %v1024
      %v1050 = vpack.c.b16 %v1027, %v1026
      %v1051 = vpack.c.b16 %v1029, %v1028
      %v1052 = vpack.c.b16 %v1031, %v1030
      %v1053 = vpack.c.b16 %v1033, %v1032
      %v1054 = vpack.c.b16 %v1035, %v1034
      %v1055 = vpack.c.b16 %v1037, %v1036
      %v1056 = vpack.c.b16 %v1039, %v1038
      %v1057 = vpack.c.b16 %v1041, %v1040
      %1058 = vrot.lane.b32.xlu0 %v1042, 8
      %v1059 = vpop.permute.xlu0 %1058
      %1060 = vrot.lane.b32.xlu0 %v1043, 8
      %v1061 = vpop.permute.xlu0 %1060
      %1062 = vrot.lane.b32.xlu0 %v1044, 8
      %v1063 = vpop.permute.xlu0 %1062
      %1064 = vrot.lane.b32.xlu0 %v1045, 8
      %v1065 = vpop.permute.xlu0 %1064
      %1066 = vrot.lane.b32.xlu0 %v1046, 8
      %v1067 = vpop.permute.xlu0 %1066
      %1068 = vrot.lane.b32.xlu0 %v1047, 8
      %v1069 = vpop.permute.xlu0 %1068
      %1070 = vrot.lane.b32.xlu0 %v1048, 8
      %v1071 = vpop.permute.xlu0 %1070
      %1072 = vrot.lane.b32.xlu0 %v1049, 8
      %v1073 = vpop.permute.xlu0 %1072
      %1074 = vrot.lane.b32.xlu0 %v1050, 8
      %v1075 = vpop.permute.xlu0 %1074
      %1076 = vrot.lane.b32.xlu0 %v1051, 8
      %v1077 = vpop.permute.xlu0 %1076
      %1078 = vrot.lane.b32.xlu0 %v1052, 8
      %v1079 = vpop.permute.xlu0 %1078
      %1080 = vrot.lane.b32.xlu0 %v1053, 8
      %v1081 = vpop.permute.xlu0 %1080
      %1082 = vrot.lane.b32.xlu0 %v1054, 8
      %v1083 = vpop.permute.xlu0 %1082
      %1084 = vrot.lane.b32.xlu0 %v1055, 8
      %v1085 = vpop.permute.xlu0 %1084
      %1086 = vrot.lane.b32.xlu0 %v1056, 8
      %v1087 = vpop.permute.xlu0 %1086
      %1088 = vrot.lane.b32.xlu0 %v1057, 8
      %v1089 = vpop.permute.xlu0 %1088
      %v1090 = vunpack.c.l.b16 %v258
      %v1091 = vunpack.c.l.b16 %v259
      %v1092 = vpack.c.b16 %v1091, %v1090
      %1093 = vrot.lane.b32.xlu0 %v915, 12
      %v1094 = vpop.permute.xlu0 %1093
      %1095 = vrot.lane.b32.xlu0 %v916, 12
      %v1096 = vpop.permute.xlu0 %1095
      %1097 = vrot.lane.b32.xlu0 %v917, 12
      %v1098 = vpop.permute.xlu0 %1097
      %1099 = vrot.lane.b32.xlu0 %v918, 12
      %v1100 = vpop.permute.xlu0 %1099
      %1101 = vrot.lane.b32.xlu0 %v919, 12
      %v1102 = vpop.permute.xlu0 %1101
      %1103 = vrot.lane.b32.xlu0 %v920, 12
      %v1104 = vpop.permute.xlu0 %1103
      %1105 = vrot.lane.b32.xlu0 %v921, 12
      %v1106 = vpop.permute.xlu0 %1105
      %1107 = vrot.lane.b32.xlu0 %v922, 12
      %v1108 = vpop.permute.xlu0 %1107
      %1109 = vrot.lane.b32.xlu0 %v923, 12
      %v1110 = vpop.permute.xlu0 %1109
      %1111 = vrot.lane.b32.xlu0 %v924, 12
      %v1112 = vpop.permute.xlu0 %1111
      %1113 = vrot.lane.b32.xlu0 %v925, 12
      %v1114 = vpop.permute.xlu0 %1113
      %1115 = vrot.lane.b32.xlu0 %v926, 12
      %v1116 = vpop.permute.xlu0 %1115
      %1117 = vrot.lane.b32.xlu0 %v927, 12
      %v1118 = vpop.permute.xlu0 %1117
      %1119 = vrot.lane.b32.xlu0 %v928, 12
      %v1120 = vpop.permute.xlu0 %1119
      %1121 = vrot.lane.b32.xlu0 %v929, 12
      %v1122 = vpop.permute.xlu0 %1121
      %1123 = vrot.lane.b32.xlu0 %v1092, 12
      %v1124 = vpop.permute.xlu0 %1123
      %v1125 = vunpack.c.l.b16 %v827
      %v1126 = vunpack.c.l.b16 %v837
      %v1127 = vpack.c.b16 %v1126, %v1125
      %1128 = vrot.lane.b32.xlu0 %v963, 16
      %v1129 = vpop.permute.xlu0 %1128
      %1130 = vrot.lane.b32.xlu0 %v964, 16
      %v1131 = vpop.permute.xlu0 %1130
      %1132 = vrot.lane.b32.xlu0 %v965, 16
      %v1133 = vpop.permute.xlu0 %1132
      %1134 = vrot.lane.b32.xlu0 %v966, 16
      %v1135 = vpop.permute.xlu0 %1134
      %1136 = vrot.lane.b32.xlu0 %v967, 16
      %v1137 = vpop.permute.xlu0 %1136
      %1138 = vrot.lane.b32.xlu0 %v968, 16
      %v1139 = vpop.permute.xlu0 %1138
      %1140 = vrot.lane.b32.xlu0 %v969, 16
      %v1141 = vpop.permute.xlu0 %1140
      %1142 = vrot.lane.b32.xlu0 %v970, 16
      %v1143 = vpop.permute.xlu0 %1142
      %1144 = vrot.lane.b32.xlu0 %v971, 16
      %v1145 = vpop.permute.xlu0 %1144
      %1146 = vrot.lane.b32.xlu0 %v972, 16
      %v1147 = vpop.permute.xlu0 %1146
      %1148 = vrot.lane.b32.xlu0 %v973, 16
      %v1149 = vpop.permute.xlu0 %1148
      %1150 = vrot.lane.b32.xlu0 %v974, 16
      %v1151 = vpop.permute.xlu0 %1150
      %1152 = vrot.lane.b32.xlu0 %v975, 16
      %v1153 = vpop.permute.xlu0 %1152
      %1154 = vrot.lane.b32.xlu0 %v976, 16
      %v1155 = vpop.permute.xlu0 %1154
      %1156 = vrot.lane.b32.xlu0 %v977, 16
      %v1157 = vpop.permute.xlu0 %1156
      %1158 = vrot.lane.b32.xlu0 %v1127, 16
      %v1159 = vpop.permute.xlu0 %1158
      %v1160 = vunpack.c.l.b16 %v844
      %v1161 = vunpack.c.l.b16 %v847
      %v1162 = vpack.c.b16 %v1161, %v1160
      %1163 = vrot.lane.b32.xlu0 %v1043, 20
      %v1164 = vpop.permute.xlu0 %1163
      %1165 = vrot.lane.b32.xlu0 %v1044, 20
      %v1166 = vpop.permute.xlu0 %1165
      %1167 = vrot.lane.b32.xlu0 %v1045, 20
      %v1168 = vpop.permute.xlu0 %1167
      %1169 = vrot.lane.b32.xlu0 %v1046, 20
      %v1170 = vpop.permute.xlu0 %1169
      %1171 = vrot.lane.b32.xlu0 %v1047, 20
      %v1172 = vpop.permute.xlu0 %1171
      %1173 = vrot.lane.b32.xlu0 %v1048, 20
      %v1174 = vpop.permute.xlu0 %1173
      %1175 = vrot.lane.b32.xlu0 %v1049, 20
      %v1176 = vpop.permute.xlu0 %1175
      %1177 = vrot.lane.b32.xlu0 %v1050, 20
      %v1178 = vpop.permute.xlu0 %1177
      %1179 = vrot.lane.b32.xlu0 %v1051, 20
      %v1180 = vpop.permute.xlu0 %1179
      %1181 = vrot.lane.b32.xlu0 %v1052, 20
      %v1182 = vpop.permute.xlu0 %1181
      %1183 = vrot.lane.b32.xlu0 %v1053, 20
      %v1184 = vpop.permute.xlu0 %1183
      %1185 = vrot.lane.b32.xlu0 %v1054, 20
      %v1186 = vpop.permute.xlu0 %1185
      %1187 = vrot.lane.b32.xlu0 %v1055, 20
      %v1188 = vpop.permute.xlu0 %1187
      %1189 = vrot.lane.b32.xlu0 %v1056, 20
      %v1190 = vpop.permute.xlu0 %1189
      %1191 = vrot.lane.b32.xlu0 %v1057, 20
      %v1192 = vpop.permute.xlu0 %1191
      %1193 = vrot.lane.b32.xlu0 %v1162, 20
      %v1194 = vpop.permute.xlu0 %1193
      %v1195 = vunpack.c.l.b16 %v261
      %v1196 = vunpack.c.l.b16 %v262
      %v1197 = vpack.c.b16 %v1196, %v1195
      %1198 = vrot.lane.b32.xlu0 %v916, 24
      %v1199 = vpop.permute.xlu0 %1198
      %1200 = vrot.lane.b32.xlu0 %v917, 24
      %v1201 = vpop.permute.xlu0 %1200
      %1202 = vrot.lane.b32.xlu0 %v918, 24
      %v1203 = vpop.permute.xlu0 %1202
      %1204 = vrot.lane.b32.xlu0 %v919, 24
      %v1205 = vpop.permute.xlu0 %1204
      %1206 = vrot.lane.b32.xlu0 %v920, 24
      %v1207 = vpop.permute.xlu0 %1206
      %1208 = vrot.lane.b32.xlu0 %v921, 24
      %v1209 = vpop.permute.xlu0 %1208
      %1210 = vrot.lane.b32.xlu0 %v922, 24
      %v1211 = vpop.permute.xlu0 %1210
      %1212 = vrot.lane.b32.xlu0 %v923, 24
      %v1213 = vpop.permute.xlu0 %1212
      %1214 = vrot.lane.b32.xlu0 %v924, 24
      %v1215 = vpop.permute.xlu0 %1214
      %1216 = vrot.lane.b32.xlu0 %v925, 24
      %v1217 = vpop.permute.xlu0 %1216
      %1218 = vrot.lane.b32.xlu0 %v926, 24
      %v1219 = vpop.permute.xlu0 %1218
      %1220 = vrot.lane.b32.xlu0 %v927, 24
      %v1221 = vpop.permute.xlu0 %1220
      %1222 = vrot.lane.b32.xlu0 %v928, 24
      %v1223 = vpop.permute.xlu0 %1222
      %1224 = vrot.lane.b32.xlu0 %v929, 24
      %v1225 = vpop.permute.xlu0 %1224
      %1226 = vrot.lane.b32.xlu0 %v1092, 24
      %v1227 = vpop.permute.xlu0 %1226
      %1228 = vrot.lane.b32.xlu0 %v1197, 24
      %v1229 = vpop.permute.xlu0 %1228
      %v1230 = vunpack.c.l.b16 %v861
      %v1231 = vunpack.c.l.b16 %v871
      %v1232 = vpack.c.b16 %v1231, %v1230
      %1233 = vrot.lane.b32.xlu0 %v964, 28
      %v1234 = vpop.permute.xlu0 %1233
      %1235 = vrot.lane.b32.xlu0 %v965, 28
      %v1236 = vpop.permute.xlu0 %1235
      %1237 = vrot.lane.b32.xlu0 %v966, 28
      %v1238 = vpop.permute.xlu0 %1237
      %1239 = vrot.lane.b32.xlu0 %v967, 28
      %v1240 = vpop.permute.xlu0 %1239
      %1241 = vrot.lane.b32.xlu0 %v968, 28
      %v1242 = vpop.permute.xlu0 %1241
      %1243 = vrot.lane.b32.xlu0 %v969, 28
      %v1244 = vpop.permute.xlu0 %1243
      %1245 = vrot.lane.b32.xlu0 %v970, 28
      %v1246 = vpop.permute.xlu0 %1245
      %1247 = vrot.lane.b32.xlu0 %v971, 28
      %v1248 = vpop.permute.xlu0 %1247
      %1249 = vrot.lane.b32.xlu0 %v972, 28
      %v1250 = vpop.permute.xlu0 %1249
      %1251 = vrot.lane.b32.xlu0 %v973, 28
      %v1252 = vpop.permute.xlu0 %1251
      %1253 = vrot.lane.b32.xlu0 %v974, 28
      %v1254 = vpop.permute.xlu0 %1253
      %1255 = vrot.lane.b32.xlu0 %v975, 28
      %v1256 = vpop.permute.xlu0 %1255
      %1257 = vrot.lane.b32.xlu0 %v976, 28
      %v1258 = vpop.permute.xlu0 %1257
      %1259 = vrot.lane.b32.xlu0 %v977, 28
      %v1260 = vpop.permute.xlu0 %1259
      %1261 = vrot.lane.b32.xlu0 %v1127, 28
      %v1262 = vpop.permute.xlu0 %1261
      %1263 = vrot.lane.b32.xlu0 %v1232, 28
      %v1264 = vpop.permute.xlu0 %1263
      %v1265 = vunpack.c.l.b16 %v878
      %v1266 = vunpack.c.l.b16 %v881
      %v1267 = vpack.c.b16 %v1266, %v1265
      %1268 = vrot.lane.b32.xlu0 %v1044, 32
      %v1269 = vpop.permute.xlu0 %1268
      %1270 = vrot.lane.b32.xlu0 %v1045, 32
      %v1271 = vpop.permute.xlu0 %1270
      %1272 = vrot.lane.b32.xlu0 %v1046, 32
      %v1273 = vpop.permute.xlu0 %1272
      %1274 = vrot.lane.b32.xlu0 %v1047, 32
      %v1275 = vpop.permute.xlu0 %1274
      %1276 = vrot.lane.b32.xlu0 %v1048, 32
      %v1277 = vpop.permute.xlu0 %1276
      %1278 = vrot.lane.b32.xlu0 %v1049, 32
      %v1279 = vpop.permute.xlu0 %1278
      %1280 = vrot.lane.b32.xlu0 %v1050, 32
      %v1281 = vpop.permute.xlu0 %1280
      %1282 = vrot.lane.b32.xlu0 %v1051, 32
      %v1283 = vpop.permute.xlu0 %1282
      %1284 = vrot.lane.b32.xlu0 %v1052, 32
      %v1285 = vpop.permute.xlu0 %1284
      %1286 = vrot.lane.b32.xlu0 %v1053, 32
      %v1287 = vpop.permute.xlu0 %1286
      %1288 = vrot.lane.b32.xlu0 %v1054, 32
      %v1289 = vpop.permute.xlu0 %1288
      %1290 = vrot.lane.b32.xlu0 %v1055, 32
      %v1291 = vpop.permute.xlu0 %1290
      %1292 = vrot.lane.b32.xlu0 %v1056, 32
      %v1293 = vpop.permute.xlu0 %1292
      %1294 = vrot.lane.b32.xlu0 %v1057, 32
      %v1295 = vpop.permute.xlu0 %1294
      %1296 = vrot.lane.b32.xlu0 %v1162, 32
      %v1297 = vpop.permute.xlu0 %1296
      %1298 = vrot.lane.b32.xlu0 %v1267, 32
      %v1299 = vpop.permute.xlu0 %1298
      %vm1300 = vcmask 31744
      %v1303 = vsel %vm1300, %v914, %v979
      %v1306 = vsel %vm1300, %v915, %v981
      %v1309 = vsel %vm1300, %v916, %v983
      %v1312 = vsel %vm1300, %v917, %v985
      %v1315 = vsel %vm1300, %v918, %v987
      %v1318 = vsel %vm1300, %v919, %v989
      %v1321 = vsel %vm1300, %v920, %v991
      %v1324 = vsel %vm1300, %v921, %v993
      %v1327 = vsel %vm1300, %v922, %v995
      %v1330 = vsel %vm1300, %v923, %v997
      %v1333 = vsel %vm1300, %v924, %v999
      %v1336 = vsel %vm1300, %v925, %v1001
      %v1339 = vsel %vm1300, %v926, %v1003
      %v1342 = vsel %vm1300, %v927, %v1005
      %v1345 = vsel %vm1300, %v928, %v1007
      %v1348 = vsel %vm1300, %v929, %v1009
      %vm1349 = vcmask 64512
      %v1351 = vsel %vm1349, %v1303, %v1059
      %v1353 = vsel %vm1349, %v1306, %v1061
      %v1355 = vsel %vm1349, %v1309, %v1063
      %v1357 = vsel %vm1349, %v1312, %v1065
      %v1359 = vsel %vm1349, %v1315, %v1067
      %v1361 = vsel %vm1349, %v1318, %v1069
      %v1363 = vsel %vm1349, %v1321, %v1071
      %v1365 = vsel %vm1349, %v1324, %v1073
      %v1367 = vsel %vm1349, %v1327, %v1075
      %v1369 = vsel %vm1349, %v1330, %v1077
      %v1371 = vsel %vm1349, %v1333, %v1079
      %v1373 = vsel %vm1349, %v1336, %v1081
      %v1375 = vsel %vm1349, %v1339, %v1083
      %v1377 = vsel %vm1349, %v1342, %v1085
      %v1379 = vsel %vm1349, %v1345, %v1087
      %v1381 = vsel %vm1349, %v1348, %v1089
      %vm1382 = vcmask 97280
      %v1384 = vsel %vm1382, %v1351, %v1094
      %v1386 = vsel %vm1382, %v1353, %v1096
      %v1388 = vsel %vm1382, %v1355, %v1098
      %v1390 = vsel %vm1382, %v1357, %v1100
      %v1392 = vsel %vm1382, %v1359, %v1102
      %v1394 = vsel %vm1382, %v1361, %v1104
      %v1396 = vsel %vm1382, %v1363, %v1106
      %v1398 = vsel %vm1382, %v1365, %v1108
      %v1400 = vsel %vm1382, %v1367, %v1110
      %v1402 = vsel %vm1382, %v1369, %v1112
      %v1404 = vsel %vm1382, %v1371, %v1114
      %v1406 = vsel %vm1382, %v1373, %v1116
      %v1408 = vsel %vm1382, %v1375, %v1118
      %v1410 = vsel %vm1382, %v1377, %v1120
      %v1412 = vsel %vm1382, %v1379, %v1122
      %v1414 = vsel %vm1382, %v1381, %v1124
      %vm1415 = vcmask 130048
      %v1417 = vsel %vm1415, %v1384, %v1129
      %v1419 = vsel %vm1415, %v1386, %v1131
      %v1421 = vsel %vm1415, %v1388, %v1133
      %v1423 = vsel %vm1415, %v1390, %v1135
      %v1425 = vsel %vm1415, %v1392, %v1137
      %v1427 = vsel %vm1415, %v1394, %v1139
      %v1429 = vsel %vm1415, %v1396, %v1141
      %v1431 = vsel %vm1415, %v1398, %v1143
      %v1433 = vsel %vm1415, %v1400, %v1145
      %v1435 = vsel %vm1415, %v1402, %v1147
      %v1437 = vsel %vm1415, %v1404, %v1149
      %v1439 = vsel %vm1415, %v1406, %v1151
      %v1441 = vsel %vm1415, %v1408, %v1153
      %v1443 = vsel %vm1415, %v1410, %v1155
      %v1445 = vsel %vm1415, %v1412, %v1157
      %v1447 = vsel %vm1415, %v1414, %v1159
      %vm1448 = vcmask 162816
      %v1450 = vsel %vm1448, %v1417, %v1164
      %v1452 = vsel %vm1448, %v1419, %v1166
      %v1454 = vsel %vm1448, %v1421, %v1168
      %v1456 = vsel %vm1448, %v1423, %v1170
      %v1458 = vsel %vm1448, %v1425, %v1172
      %v1460 = vsel %vm1448, %v1427, %v1174
      %v1462 = vsel %vm1448, %v1429, %v1176
      %v1464 = vsel %vm1448, %v1431, %v1178
      %v1466 = vsel %vm1448, %v1433, %v1180
      %v1468 = vsel %vm1448, %v1435, %v1182
      %v1470 = vsel %vm1448, %v1437, %v1184
      %v1472 = vsel %vm1448, %v1439, %v1186
      %v1474 = vsel %vm1448, %v1441, %v1188
      %v1476 = vsel %vm1448, %v1443, %v1190
      %v1478 = vsel %vm1448, %v1445, %v1192
      %v1480 = vsel %vm1448, %v1447, %v1194
      %vm1481 = vcmask 195584
      %v1483 = vsel %vm1481, %v1450, %v1199
      %v1485 = vsel %vm1481, %v1452, %v1201
      %v1487 = vsel %vm1481, %v1454, %v1203
      %v1489 = vsel %vm1481, %v1456, %v1205
      %v1491 = vsel %vm1481, %v1458, %v1207
      %v1493 = vsel %vm1481, %v1460, %v1209
      %v1495 = vsel %vm1481, %v1462, %v1211
      %v1497 = vsel %vm1481, %v1464, %v1213
      %v1499 = vsel %vm1481, %v1466, %v1215
      %v1501 = vsel %vm1481, %v1468, %v1217
      %v1503 = vsel %vm1481, %v1470, %v1219
      %v1505 = vsel %vm1481, %v1472, %v1221
      %v1507 = vsel %vm1481, %v1474, %v1223
      %v1509 = vsel %vm1481, %v1476, %v1225
      %v1511 = vsel %vm1481, %v1478, %v1227
      %v1513 = vsel %vm1481, %v1480, %v1229
      %vm1514 = vcmask 228352
      %v1516 = vsel %vm1514, %v1483, %v1234
      %v1518 = vsel %vm1514, %v1485, %v1236
      %v1520 = vsel %vm1514, %v1487, %v1238
      %v1522 = vsel %vm1514, %v1489, %v1240
      %v1524 = vsel %vm1514, %v1491, %v1242
      %v1526 = vsel %vm1514, %v1493, %v1244
      %v1528 = vsel %vm1514, %v1495, %v1246
      %v1530 = vsel %vm1514, %v1497, %v1248
      %v1532 = vsel %vm1514, %v1499, %v1250
      %v1534 = vsel %vm1514, %v1501, %v1252
      %v1536 = vsel %vm1514, %v1503, %v1254
      %v1538 = vsel %vm1514, %v1505, %v1256
      %v1540 = vsel %vm1514, %v1507, %v1258
      %v1542 = vsel %vm1514, %v1509, %v1260
      %v1544 = vsel %vm1514, %v1511, %v1262
      %v1546 = vsel %vm1514, %v1513, %v1264
      %vm1547 = vcmask 261120
      %v1549 = vsel %vm1547, %v1516, %v1269
      %v1551 = vsel %vm1547, %v1518, %v1271
      %v1553 = vsel %vm1547, %v1520, %v1273
      %v1555 = vsel %vm1547, %v1522, %v1275
      %v1557 = vsel %vm1547, %v1524, %v1277
      %v1559 = vsel %vm1547, %v1526, %v1279
      %v1561 = vsel %vm1547, %v1528, %v1281
      %v1563 = vsel %vm1547, %v1530, %v1283
      %v1565 = vsel %vm1547, %v1532, %v1285
      %v1567 = vsel %vm1547, %v1534, %v1287
      %v1569 = vsel %vm1547, %v1536, %v1289
      %v1571 = vsel %vm1547, %v1538, %v1291
      %v1573 = vsel %vm1547, %v1540, %v1293
      %v1575 = vsel %vm1547, %v1542, %v1295
      %v1577 = vsel %vm1547, %v1544, %v1297
      %v1579 = vsel %vm1547, %v1546, %v1299
      %v1580 = vld [vmem:[%s1] sm:$0xf]
      %v1581 = vld [vmem:[%s1 + $0x4] sm:$0xf]
      %v1582 = vld [vmem:[%s1 + $0x8] sm:$0xf]
      %v1583 = vld [vmem:[%s1 + $0xc] sm:$0xf]
      %v1584 = vld [vmem:[%s1 + $0x10] sm:$0x3]
      %v1585 = vld [vmem:[%s2] sm:$0x1]
      %v1587 = vlaneseq
      %v1588 = vshrl.u32 %v1587, 7
      %v1589 = vsub.s32 0, %v1588
      %v1590 = vrot.slane %v1585, %v1589
      %v1597 = vunpack.c.l.b16 %v1580
      %v1598 = vunpack.c.l.b16 %v1581
      %v1599 = vunpack.c.l.b16 %v1582
      %v1600 = vunpack.c.l.b16 %v1583
      %v1601 = vunpack.c.l.b16 %v1584
      %v1602 = vpack.c.b16 %v1598, %v1597
      %v1603 = vpack.c.b16 %v1600, %v1599
      %v1604 = vpack.c.b16 %v1601, %v1601
      %vm1607 = vcmask 293888
      %v1608 = vsel %vm1607, %v1549, 0
      %v1610 = vsel %vm1607, %v1551, 0
      %v1612 = vsel %vm1607, %v1553, 0
      %v1614 = vsel %vm1607, %v1555, 0
      %v1616 = vsel %vm1607, %v1557, 0
      %v1618 = vsel %vm1607, %v1559, 0
      %v1620 = vsel %vm1607, %v1561, 0
      %v1622 = vsel %vm1607, %v1563, 0
      %v1624 = vsel %vm1607, %v1565, 0
      %v1626 = vsel %vm1607, %v1567, 0
      %v1628 = vsel %vm1607, %v1569, 0
      %v1630 = vsel %vm1607, %v1571, 0
      %v1632 = vsel %vm1607, %v1573, 0
      %v1634 = vsel %vm1607, %v1575, 0
      %v1636 = vsel %vm1607, %v1577, 0
      %v1638 = vsel %vm1607, %v1579, 0
      %vm1640 = vcmask 1041408
      %v1642 = vsel %vm1640, %v1604, 0
      %1644 = vmatprep.subr.bf16.mxu0 0
      %1645 = vmatpush1.bf16.msra.mxu0 0
      %1646 = vmatprep.subr.bf16.mxu0 0
      %1647 = vmatpush1.bf16.msra.mxu0 0
      %1648 = vmatprep.subr.bf16.mxu0 0
      %1649 = vmatpush1.bf16.msra.mxu0 0
      %1650 = vmatprep.subr.bf16.mxu0 0
      %1651 = vmatpush1.bf16.msra.mxu0 0
      %1652 = vmatprep.subr.bf16.mxu0 0
      %1653 = vmatpush1.bf16.msra.mxu0 0
      %1654 = vmatprep.subr.bf16.mxu0 0
      %1655 = vmatpush1.bf16.msra.mxu0 %v1642
      %1656 = vmatprep.subr.bf16.mxu0 0
      %1657 = vmatpush1.bf16.msra.mxu0 %v1603
      %1658 = vmatprep.subr.bf16.mxu0 0
      %1659 = vmatpush1.bf16.msra.mxu0 %v1602
      %1660 = vmatprep.subr.bf16.mxu0 0
      %1661 = vmatpush2.bf16.msra.mxu0 0
      %1662 = vmatprep.subr.bf16.mxu0 0
      %1663 = vmatpush2.bf16.msra.mxu0 0
      %1664 = vmatprep.subr.bf16.mxu0 0
      %1665 = vmatpush2.bf16.msra.mxu0 0
      %1666 = vmatprep.subr.bf16.mxu0 0
      %1667 = vmatpush2.bf16.msra.mxu0 0
      %1668 = vmatprep.subr.bf16.mxu0 0
      %1669 = vmatpush2.bf16.msra.mxu0 0
      %1670 = vmatprep.subr.bf16.mxu0 0
      %1671 = vmatpush2.bf16.msra.mxu0 0
      %1672 = vmatprep.subr.bf16.mxu0 0
      %1673 = vmatpush2.bf16.msra.mxu0 0
      %1674 = vmatprep.subr.bf16.mxu0 0
      %1675 = vmatpush2.bf16.msra.mxu0 0
      %1676 = vmatprep.mubr.bf16.mxu0 0
      %1677 = vmatmul.mubr.bf16.gmra.mxu0 %v1608
      %v1678 = vpop.f32.mrf.mxu0
      %v1679 = vadd.f32 %v1590, %v1678
      %v1680 = vpop.f32.mrf.mxu0
      %v1681 = vpop.f32.mrf.mxu0
      %v1682 = vadd.f32 %v1590, %v1681
      %v1683 = vpop.f32.mrf.mxu0
      %1684 = vmatprep.mubr.bf16.mxu0 0
      %1685 = vmatmul.mubr.bf16.gmra.mxu0 %v1610
      %v1686 = vpop.f32.mrf.mxu0
      %v1687 = vadd.f32 %v1590, %v1686
      %v1688 = vpop.f32.mrf.mxu0
      %v1689 = vpop.f32.mrf.mxu0
      %v1690 = vadd.f32 %v1590, %v1689
      %v1691 = vpop.f32.mrf.mxu0
      %1692 = vmatprep.mubr.bf16.mxu0 0
      %1693 = vmatmul.mubr.bf16.gmra.mxu0 %v1612
      %v1694 = vpop.f32.mrf.mxu0
      %v1695 = vadd.f32 %v1590, %v1694
      %v1696 = vpop.f32.mrf.mxu0
      %v1697 = vpop.f32.mrf.mxu0
      %v1698 = vadd.f32 %v1590, %v1697
      %v1699 = vpop.f32.mrf.mxu0
      %1700 = vmatprep.mubr.bf16.mxu0 0
      %1701 = vmatmul.mubr.bf16.gmra.mxu0 %v1614
      %v1702 = vpop.f32.mrf.mxu0
      %v1703 = vadd.f32 %v1590, %v1702
      %v1704 = vpop.f32.mrf.mxu0
      %v1705 = vpop.f32.mrf.mxu0
      %v1706 = vadd.f32 %v1590, %v1705
      %v1707 = vpop.f32.mrf.mxu0
      %1708 = vmatprep.mubr.bf16.mxu0 0
      %1709 = vmatmul.mubr.bf16.gmra.mxu0 %v1616
      %v1710 = vpop.f32.mrf.mxu0
      %v1711 = vadd.f32 %v1590, %v1710
      %v1712 = vpop.f32.mrf.mxu0
      %v1713 = vpop.f32.mrf.mxu0
      %v1714 = vadd.f32 %v1590, %v1713
      %v1715 = vpop.f32.mrf.mxu0
      %1716 = vmatprep.mubr.bf16.mxu0 0
      %1717 = vmatmul.mubr.bf16.gmra.mxu0 %v1618
      %v1718 = vpop.f32.mrf.mxu0
      %v1719 = vadd.f32 %v1590, %v1718
      %v1720 = vpop.f32.mrf.mxu0
      %v1721 = vpop.f32.mrf.mxu0
      %v1722 = vadd.f32 %v1590, %v1721
      %v1723 = vpop.f32.mrf.mxu0
      %1724 = vmatprep.mubr.bf16.mxu0 0
      %1725 = vmatmul.mubr.bf16.gmra.mxu0 %v1620
      %v1726 = vpop.f32.mrf.mxu0
      %v1727 = vadd.f32 %v1590, %v1726
      %v1728 = vpop.f32.mrf.mxu0
      %v1729 = vpop.f32.mrf.mxu0
      %v1730 = vadd.f32 %v1590, %v1729
      %v1731 = vpop.f32.mrf.mxu0
      %1732 = vmatprep.mubr.bf16.mxu0 0
      %1733 = vmatmul.mubr.bf16.gmra.mxu0 %v1622
      %v1734 = vpop.f32.mrf.mxu0
      %v1735 = vadd.f32 %v1590, %v1734
      %v1736 = vpop.f32.mrf.mxu0
      %v1737 = vpop.f32.mrf.mxu0
      %v1738 = vadd.f32 %v1590, %v1737
      %v1739 = vpop.f32.mrf.mxu0
      %1740 = vmatprep.mubr.bf16.mxu0 0
      %1741 = vmatmul.mubr.bf16.gmra.mxu0 %v1624
      %v1742 = vpop.f32.mrf.mxu0
      %v1743 = vadd.f32 %v1590, %v1742
      %v1744 = vpop.f32.mrf.mxu0
      %v1745 = vpop.f32.mrf.mxu0
      %v1746 = vadd.f32 %v1590, %v1745
      %v1747 = vpop.f32.mrf.mxu0
      %1748 = vmatprep.mubr.bf16.mxu0 0
      %1749 = vmatmul.mubr.bf16.gmra.mxu0 %v1626
      %v1750 = vpop.f32.mrf.mxu0
      %v1751 = vadd.f32 %v1590, %v1750
      %v1752 = vpop.f32.mrf.mxu0
      %v1753 = vpop.f32.mrf.mxu0
      %v1754 = vadd.f32 %v1590, %v1753
      %v1755 = vpop.f32.mrf.mxu0
      %1756 = vmatprep.mubr.bf16.mxu0 0
      %1757 = vmatmul.mubr.bf16.gmra.mxu0 %v1628
      %v1758 = vpop.f32.mrf.mxu0
      %v1759 = vadd.f32 %v1590, %v1758
      %v1760 = vpop.f32.mrf.mxu0
      %v1761 = vpop.f32.mrf.mxu0
      %v1762 = vadd.f32 %v1590, %v1761
      %v1763 = vpop.f32.mrf.mxu0
      %1764 = vmatprep.mubr.bf16.mxu0 0
      %1765 = vmatmul.mubr.bf16.gmra.mxu0 %v1630
      %v1766 = vpop.f32.mrf.mxu0
      %v1767 = vadd.f32 %v1590, %v1766
      %v1768 = vpop.f32.mrf.mxu0
      %v1769 = vpop.f32.mrf.mxu0
      %v1770 = vadd.f32 %v1590, %v1769
      %v1771 = vpop.f32.mrf.mxu0
      %1772 = vmatprep.mubr.bf16.mxu0 0
      %1773 = vmatmul.mubr.bf16.gmra.mxu0 %v1632
      %v1774 = vpop.f32.mrf.mxu0
      %v1775 = vadd.f32 %v1590, %v1774
      %v1776 = vpop.f32.mrf.mxu0
      %v1777 = vpop.f32.mrf.mxu0
      %v1778 = vadd.f32 %v1590, %v1777
      %v1779 = vpop.f32.mrf.mxu0
      %1780 = vmatprep.mubr.bf16.mxu0 0
      %1781 = vmatmul.mubr.bf16.gmra.mxu0 %v1634
      %v1782 = vpop.f32.mrf.mxu0
      %v1783 = vadd.f32 %v1590, %v1782
      %v1784 = vpop.f32.mrf.mxu0
      %v1785 = vpop.f32.mrf.mxu0
      %v1786 = vadd.f32 %v1590, %v1785
      %v1787 = vpop.f32.mrf.mxu0
      %1788 = vmatprep.mubr.bf16.mxu0 0
      %1789 = vmatmul.mubr.bf16.gmra.mxu0 %v1636
      %v1790 = vpop.f32.mrf.mxu0
      %v1791 = vadd.f32 %v1590, %v1790
      %v1792 = vpop.f32.mrf.mxu0
      %v1793 = vpop.f32.mrf.mxu0
      %v1794 = vadd.f32 %v1590, %v1793
      %v1795 = vpop.f32.mrf.mxu0
      %1796 = vmatprep.mubr.bf16.mxu0 0
      %1797 = vmatmul.mubr.bf16.gmra.mxu0 %v1638
      %v1798 = vpop.f32.mrf.mxu0
      %v1799 = vadd.f32 %v1590, %v1798
      %v1800 = vpop.f32.mrf.mxu0
      %v1801 = vpop.f32.mrf.mxu0
      %v1802 = vadd.f32 %v1590, %v1801
      %v1803 = vpop.f32.mrf.mxu0
      %1804 = vdwg.mxu0
      %1805 = vst.msk [vmem:[%s204] sm:$0xff] %vm1547, %v1679
      %1806 = vst.msk [vmem:[%s204 + $0x8] sm:$0xff] %vm1547, %v1682
      %1807 = vst.msk [vmem:[%s204 + $0x10] sm:$0xff] %vm1547, %v1687
      %1808 = vst.msk [vmem:[%s204 + $0x18] sm:$0xff] %vm1547, %v1690
      %1809 = vst.msk [vmem:[%s204 + $0x20] sm:$0xff] %vm1547, %v1695
      %1810 = vst.msk [vmem:[%s204 + $0x28] sm:$0xff] %vm1547, %v1698
      %1811 = vst.msk [vmem:[%s204 + $0x30] sm:$0xff] %vm1547, %v1703
      %1812 = vst.msk [vmem:[%s204 + $0x38] sm:$0xff] %vm1547, %v1706
      %1813 = vst.msk [vmem:[%s204 + $0x40] sm:$0xff] %vm1547, %v1711
      %1814 = vst.msk [vmem:[%s204 + $0x48] sm:$0xff] %vm1547, %v1714
      %1815 = vst.msk [vmem:[%s204 + $0x50] sm:$0xff] %vm1547, %v1719
      %1816 = vst.msk [vmem:[%s204 + $0x58] sm:$0xff] %vm1547, %v1722
      %1817 = vst.msk [vmem:[%s204 + $0x60] sm:$0xff] %vm1547, %v1727
      %1818 = vst.msk [vmem:[%s204 + $0x68] sm:$0xff] %vm1547, %v1730
      %1819 = vst.msk [vmem:[%s204 + $0x70] sm:$0xff] %vm1547, %v1735
      %1820 = vst.msk [vmem:[%s204 + $0x78] sm:$0xff] %vm1547, %v1738
      %1821 = vst.msk [vmem:[%s204 + $0x80] sm:$0xff] %vm1547, %v1743
      %1822 = vst.msk [vmem:[%s204 + $0x88] sm:$0xff] %vm1547, %v1746
      %1823 = vst.msk [vmem:[%s204 + $0x90] sm:$0xff] %vm1547, %v1751
      %1824 = vst.msk [vmem:[%s204 + $0x98] sm:$0xff] %vm1547, %v1754
      %1825 = vst.msk [vmem:[%s204 + $0xa0] sm:$0xff] %vm1547, %v1759
      %1826 = vst.msk [vmem:[%s204 + $0xa8] sm:$0xff] %vm1547, %v1762
      %1827 = vst.msk [vmem:[%s204 + $0xb0] sm:$0xff] %vm1547, %v1767
      %1828 = vst.msk [vmem:[%s204 + $0xb8] sm:$0xff] %vm1547, %v1770
      %1829 = vst.msk [vmem:[%s204 + $0xc0] sm:$0xff] %vm1547, %v1775
      %1830 = vst.msk [vmem:[%s204 + $0xc8] sm:$0xff] %vm1547, %v1778
      %1831 = vst.msk [vmem:[%s204 + $0xd0] sm:$0xff] %vm1547, %v1783
      %1832 = vst.msk [vmem:[%s204 + $0xd8] sm:$0xff] %vm1547, %v1786
      %1833 = vst.msk [vmem:[%s204 + $0xe0] sm:$0xff] %vm1547, %v1791
      %1834 = vst.msk [vmem:[%s204 + $0xe8] sm:$0xff] %vm1547, %v1794
      %1835 = vst.msk [vmem:[%s204 + $0xf0] sm:$0xff] %vm1547, %v1799
      %1836 = vst.msk [vmem:[%s204 + $0xf8] sm:$0xff] %vm1547, %v1802
      %v1837 = vsel %vm1547, %v1679, 0.0
      %v1838 = vsel %vm1547, %v1682, 0.0
      %v1839 = vadd.f32 %v1837, %v1838
      %v1840 = vsel %vm1547, %v1687, 0.0
      %v1841 = vadd.f32 %v1839, %v1840
      %v1842 = vsel %vm1547, %v1690, 0.0
      %v1843 = vadd.f32 %v1841, %v1842
      %v1844 = vsel %vm1547, %v1695, 0.0
      %v1845 = vadd.f32 %v1843, %v1844
      %v1846 = vsel %vm1547, %v1698, 0.0
      %v1847 = vadd.f32 %v1845, %v1846
      %v1848 = vsel %vm1547, %v1703, 0.0
      %v1849 = vadd.f32 %v1847, %v1848
      %v1850 = vsel %vm1547, %v1706, 0.0
      %v1851 = vadd.f32 %v1849, %v1850
      %v1852 = vsel %vm1547, %v1711, 0.0
      %v1853 = vadd.f32 %v1851, %v1852
      %v1854 = vsel %vm1547, %v1714, 0.0
      %v1855 = vadd.f32 %v1853, %v1854
      %v1856 = vsel %vm1547, %v1719, 0.0
      %v1857 = vadd.f32 %v1855, %v1856
      %v1858 = vsel %vm1547, %v1722, 0.0
      %v1859 = vadd.f32 %v1857, %v1858
      %v1860 = vsel %vm1547, %v1727, 0.0
      %v1861 = vadd.f32 %v1859, %v1860
      %v1862 = vsel %vm1547, %v1730, 0.0
      %v1863 = vadd.f32 %v1861, %v1862
      %v1864 = vsel %vm1547, %v1735, 0.0
      %v1865 = vadd.f32 %v1863, %v1864
      %v1866 = vsel %vm1547, %v1738, 0.0
      %v1867 = vadd.f32 %v1865, %v1866
      %v1868 = vsel %vm1547, %v1743, 0.0
      %v1869 = vadd.f32 %v1867, %v1868
      %v1870 = vsel %vm1547, %v1746, 0.0
      %v1871 = vadd.f32 %v1869, %v1870
      %v1872 = vsel %vm1547, %v1751, 0.0
      %v1873 = vadd.f32 %v1871, %v1872
      %v1874 = vsel %vm1547, %v1754, 0.0
      %v1875 = vadd.f32 %v1873, %v1874
      %v1876 = vsel %vm1547, %v1759, 0.0
      %v1877 = vadd.f32 %v1875, %v1876
      %v1878 = vsel %vm1547, %v1762, 0.0
      %v1879 = vadd.f32 %v1877, %v1878
      %v1880 = vsel %vm1547, %v1767, 0.0
      %v1881 = vadd.f32 %v1879, %v1880
      %v1882 = vsel %vm1547, %v1770, 0.0
      %v1883 = vadd.f32 %v1881, %v1882
      %v1884 = vsel %vm1547, %v1775, 0.0
      %v1885 = vadd.f32 %v1883, %v1884
      %v1886 = vsel %vm1547, %v1778, 0.0
      %v1887 = vadd.f32 %v1885, %v1886
      %v1888 = vsel %vm1547, %v1783, 0.0
      %v1889 = vadd.f32 %v1887, %v1888
      %v1890 = vsel %vm1547, %v1786, 0.0
      %v1891 = vadd.f32 %v1889, %v1890
      %v1892 = vsel %vm1547, %v1791, 0.0
      %v1893 = vadd.f32 %v1891, %v1892
      %v1894 = vsel %vm1547, %v1794, 0.0
      %v1895 = vadd.f32 %v1893, %v1894
      %v1896 = vsel %vm1547, %v1799, 0.0
      %v1897 = vadd.f32 %v1895, %v1896
      %v1898 = vsel %vm1547, %v1802, 0.0
      %v1899 = vadd.f32 %v1897, %v1898
      %v1900 = vrot.slane %v1899, 4
      %v1901 = vadd.f32 %v1899, %v1900
      %v1902 = vrot.slane %v1901, 2
      %v1903 = vadd.f32 %v1901, %v1902
      %v1904 = vrot.slane %v1903, 1
      %v1905 = vadd.f32 %v1903, %v1904
      %vm1906 = vcmask 253952
      %1907 = vst.msk [vmem:[%s208] sm:$0x1] %vm1906, %v1905
      %v1908 = vmul.f32 %v1679, %v1679
      %v1909 = vmul.f32 %v1682, %v1682
      %v1910 = vmul.f32 %v1687, %v1687
      %v1911 = vmul.f32 %v1690, %v1690
      %v1912 = vmul.f32 %v1695, %v1695
      %v1913 = vmul.f32 %v1698, %v1698
      %v1914 = vmul.f32 %v1703, %v1703
      %v1915 = vmul.f32 %v1706, %v1706
      %v1916 = vmul.f32 %v1711, %v1711
      %v1917 = vmul.f32 %v1714, %v1714
      %v1918 = vmul.f32 %v1719, %v1719
      %v1919 = vmul.f32 %v1722, %v1722
      %v1920 = vmul.f32 %v1727, %v1727
      %v1921 = vmul.f32 %v1730, %v1730
      %v1922 = vmul.f32 %v1735, %v1735
      %v1923 = vmul.f32 %v1738, %v1738
      %v1924 = vmul.f32 %v1743, %v1743
      %v1925 = vmul.f32 %v1746, %v1746
      %v1926 = vmul.f32 %v1751, %v1751
      %v1927 = vmul.f32 %v1754, %v1754
      %v1928 = vmul.f32 %v1759, %v1759
      %v1929 = vmul.f32 %v1762, %v1762
      %v1930 = vmul.f32 %v1767, %v1767
      %v1931 = vmul.f32 %v1770, %v1770
      %v1932 = vmul.f32 %v1775, %v1775
      %v1933 = vmul.f32 %v1778, %v1778
      %v1934 = vmul.f32 %v1783, %v1783
      %v1935 = vmul.f32 %v1786, %v1786
      %v1936 = vmul.f32 %v1791, %v1791
      %v1937 = vmul.f32 %v1794, %v1794
      %v1938 = vmul.f32 %v1799, %v1799
      %v1939 = vmul.f32 %v1802, %v1802
      %v1940 = vsel %vm1547, %v1908, 0.0
      %v1941 = vsel %vm1547, %v1909, 0.0
      %v1942 = vadd.f32 %v1940, %v1941
      %v1943 = vsel %vm1547, %v1910, 0.0
      %v1944 = vadd.f32 %v1942, %v1943
      %v1945 = vsel %vm1547, %v1911, 0.0
      %v1946 = vadd.f32 %v1944, %v1945
      %v1947 = vsel %vm1547, %v1912, 0.0
      %v1948 = vadd.f32 %v1946, %v1947
      %v1949 = vsel %vm1547, %v1913, 0.0
      %v1950 = vadd.f32 %v1948, %v1949
      %v1951 = vsel %vm1547, %v1914, 0.0
      %v1952 = vadd.f32 %v1950, %v1951
      %v1953 = vsel %vm1547, %v1915, 0.0
      %v1954 = vadd.f32 %v1952, %v1953
      %v1955 = vsel %vm1547, %v1916, 0.0
      %v1956 = vadd.f32 %v1954, %v1955
      %v1957 = vsel %vm1547, %v1917, 0.0
      %v1958 = vadd.f32 %v1956, %v1957
      %v1959 = vsel %vm1547, %v1918, 0.0
      %v1960 = vadd.f32 %v1958, %v1959
      %v1961 = vsel %vm1547, %v1919, 0.0
      %v1962 = vadd.f32 %v1960, %v1961
      %v1963 = vsel %vm1547, %v1920, 0.0
      %v1964 = vadd.f32 %v1962, %v1963
      %v1965 = vsel %vm1547, %v1921, 0.0
      %v1966 = vadd.f32 %v1964, %v1965
      %v1967 = vsel %vm1547, %v1922, 0.0
      %v1968 = vadd.f32 %v1966, %v1967
      %v1969 = vsel %vm1547, %v1923, 0.0
      %v1970 = vadd.f32 %v1968, %v1969
      %v1971 = vsel %vm1547, %v1924, 0.0
      %v1972 = vadd.f32 %v1970, %v1971
      %v1973 = vsel %vm1547, %v1925, 0.0
      %v1974 = vadd.f32 %v1972, %v1973
      %v1975 = vsel %vm1547, %v1926, 0.0
      %v1976 = vadd.f32 %v1974, %v1975
      %v1977 = vsel %vm1547, %v1927, 0.0
      %v1978 = vadd.f32 %v1976, %v1977
      %v1979 = vsel %vm1547, %v1928, 0.0
      %v1980 = vadd.f32 %v1978, %v1979
      %v1981 = vsel %vm1547, %v1929, 0.0
      %v1982 = vadd.f32 %v1980, %v1981
      %v1983 = vsel %vm1547, %v1930, 0.0
      %v1984 = vadd.f32 %v1982, %v1983
      %v1985 = vsel %vm1547, %v1931, 0.0
      %v1986 = vadd.f32 %v1984, %v1985
      %v1987 = vsel %vm1547, %v1932, 0.0
      %v1988 = vadd.f32 %v1986, %v1987
      %v1989 = vsel %vm1547, %v1933, 0.0
      %v1990 = vadd.f32 %v1988, %v1989
      %v1991 = vsel %vm1547, %v1934, 0.0
      %v1992 = vadd.f32 %v1990, %v1991
      %v1993 = vsel %vm1547, %v1935, 0.0
      %v1994 = vadd.f32 %v1992, %v1993
      %v1995 = vsel %vm1547, %v1936, 0.0
      %v1996 = vadd.f32 %v1994, %v1995
      %v1997 = vsel %vm1547, %v1937, 0.0
      %v1998 = vadd.f32 %v1996, %v1997
      %v1999 = vsel %vm1547, %v1938, 0.0
      %v2000 = vadd.f32 %v1998, %v1999
      %v2001 = vsel %vm1547, %v1939, 0.0
      %v2002 = vadd.f32 %v2000, %v2001
      %v2003 = vrot.slane %v2002, 4
      %v2004 = vadd.f32 %v2002, %v2003
      %v2005 = vrot.slane %v2004, 2
      %v2006 = vadd.f32 %v2004, %v2005
      %v2007 = vrot.slane %v2006, 1
      %v2008 = vadd.f32 %v2006, %v2007
      %2009 = vst.msk [vmem:[%s208 + $0x1] sm:$0x1] %vm1906, %v2008
      %p2010 = scmp.lt.s32.totalorder %s16, 1
      %s2011 = scalar_select %p2010, %s16, 1
      %s2012 = smul.addr %s2011, 32
      %s2013 = smul.addr %s2012, 8
      %s2014 = scalar_lea.vmem %s3, %s2013
      %p2015 = scmp.lt.s32.totalorder %s16, 1
      %s2016 = scalar_select %p2015, %s16, 1
      %s2017 = smul.addr %s2016, 2
      %s2018 = scalar_lea.vmem %s4, %s2017
      // Predicated region
      $region33: #{up_conv_forward.2} parent=31 // pred_check
        %p2019 = pneg %p102
      $region34: #{up_conv_forward.2} parent=31 // pred_check_branch
        %2021 = sbr.rel (%p2019) target = $region36
      $region35: #{up_conv_forward.2} parent=31 // pred_region
        _
      $region36: #{up_conv_forward.2} parent=31 // pred_fallthru
        _
      // Predicated region
      $region37: #{up_conv_forward.2} parent=31 // pred_check
        %p2022 = pneg %p128
      $region38: #{up_conv_forward.2} parent=31 // pred_check_branch
        %2024 = sbr.rel (%p2022) target = $region40
      $region39: #{up_conv_forward.2} parent=31 // pred_region
        _
      $region40: #{up_conv_forward.2} parent=31 // pred_fallthru
        _
    $region32: #{up_conv_forward.2} parent=5 // pred_fallthru
      _
    %p2025 = scmp.le.s32.totalorder 2, %s11
    // Predicated region
    $region41: #{up_conv_forward.2} parent=5 // pred_check
      %p2026 = pneg %p2025
    $region42: #{up_conv_forward.2} parent=5 // pred_check_branch
      %2028 = sbr.rel (%p2026) target = $region44
    $region43: #{up_conv_forward.2} parent=5 // pred_region
      %s2029 = ssub.s32 %s11, 2
      // Predicated region
      $region45: #{up_conv_forward.2} parent=43 // pred_check
        %p2030 = pneg %p108
      $region46: #{up_conv_forward.2} parent=43 // pred_check_branch
        %2032 = sbr.rel (%p2030) target = $region48
      $region47: #{up_conv_forward.2} parent=43 // pred_region
        %p2033 = scmp.lt.s32.totalorder %s17, 1
        %s2034 = scalar_select %p2033, %s17, 1
        %s2035 = smul.addr %s2034, 32
        %s2036 = smul.addr %s2035, 8
        %s2037 = scalar_lea.vmem %s3, %s2036
      $region48: #{up_conv_forward.2} parent=43 // pred_fallthru
        _
      // Predicated region
      $region49: #{up_conv_forward.2} parent=43 // pred_check
        %p2038 = pneg %p134
      $region50: #{up_conv_forward.2} parent=43 // pred_check_branch
        %2040 = sbr.rel (%p2038) target = $region52
      $region51: #{up_conv_forward.2} parent=43 // pred_region
        %p2041 = scmp.lt.s32.totalorder %s17, 1
        %s2042 = scalar_select %p2041, %s17, 1
        %s2043 = smul.addr %s2042, 2
        %s2044 = scalar_lea.vmem %s4, %s2043
      $region52: #{up_conv_forward.2} parent=43 // pred_fallthru
        _
    $region44: #{up_conv_forward.2} parent=5 // pred_fallthru
      _
  $region6: #{up_conv_forward.2} parent=0 // loop_footer
    %s15 = sadd.s32 1, %s11
  $region7: #{up_conv_forward.2} parent=0 // loop_footer_branch
    %10 = sbr.rel target = $region3
  $region8: #{up_conv_forward.2} parent=0 // loop_exit
    _

</llo_original>
